<compile_context>
chip_gen: v5e
topology: v5e:2x2
jax: 0.10.0
libtpu: 0.0.40
codegen_flags: <defaults>
</compile_context>

<pallas_src>
import functools

import jax
import jax.numpy as jnp
from jax import lax
from jax.experimental import pallas as pl
from jax.experimental.pallas import tpu as pltpu

_LANE = 128  # channel (lane-axis) padding granularity


def _silu(x):
    return x * jax.nn.sigmoid(x)


def _round_up(v, m):
    return (v + m - 1) // m * m


# ---------------------------------------------------------------------------
# Fused kernel: one (batch, row-tile) grid step computes
#   out = [x +] SiLU(conv3x3(SiLU(conv1x1(x) + b1)) + b2)
# with BN scales pre-folded into the conv weights.
# ---------------------------------------------------------------------------
def _bottleneck_fused_kernel(x_tile_ref, x_hbm, w1_ref, b1_ref, w2_ref, b2_ref,
                             o_ref, halo_buf, sem, *, add):
    n = pl.program_id(0)
    t = pl.program_id(1)
    n_tiles = pl.num_programs(1)

    _, th, w, c1p = x_tile_ref.shape          # pipelined x block (1, th, W, C1p)
    cm = w1_ref.shape[1]                      # padded hidden channels
    c2p = w2_ref.shape[2]
    row0 = t * th

    # ---- 1-row halo DMAs (tiny); the bulk tile arrives via the BlockSpec
    #      pipeline, already overlapped with the previous step's compute. ----
    def _top():
        return pltpu.make_async_copy(x_hbm.at[n, pl.ds(row0 - 1, 1)],
                                     halo_buf.at[0], sem.at[0])

    def _bot():
        return pltpu.make_async_copy(x_hbm.at[n, pl.ds(row0 + th, 1)],
                                     halo_buf.at[1], sem.at[1])

    @pl.when(t > 0)
    def _():
        _top().start()

    @pl.when(t == 0)
    def _():  # image top boundary: keep the scratch deterministic (no stale VMEM)
        halo_buf[0] = jnp.zeros((1, w, c1p), halo_buf.dtype)

    @pl.when(t < n_tiles - 1)
    def _():
        _bot().start()

    @pl.when(t == n_tiles - 1)
    def _():
        halo_buf[1] = jnp.zeros((1, w, c1p), halo_buf.dtype)

    # ---- cv1 on the interior rows (overlaps with the halo DMAs) -----------
    xi = x_tile_ref[0]                                        # (th, W, C1p)
    y1i = jnp.dot(xi.reshape(th * w, c1p), w1_ref[...],
                  preferred_element_type=jnp.float32)
    y1i = _silu(y1i + b1_ref[...]).reshape(th, w, cm)         # f32

    # ---- cv1 on the two halo rows ------------------------------------------
    @pl.when(t > 0)
    def _():
        _top().wait()

    @pl.when(t < n_tiles - 1)
    def _():
        _bot().wait()

    xh = halo_buf[...].reshape(2 * w, c1p)
    y1h = jnp.dot(xh, w1_ref[...], preferred_element_type=jnp.float32)
    y1h = _silu(y1h + b1_ref[...]).reshape(2, w, cm)
    # cv2's zero padding applies to its *input* y1: boundary halo rows are 0.
    y1_top = jnp.where(t > 0, y1h[0:1], 0.0)
    y1_bot = jnp.where(t < n_tiles - 1, y1h[1:2], 0.0)
    y1 = jnp.concatenate([y1_top, y1i, y1_bot], axis=0)       # (th+2, W, cm)

    # ---- cv2: 3x3 conv as 3 MXU matmuls with K = 3*cm ----------------------
    # Pack the 3 row taps along lanes once (cm is a multiple of 128 so the
    # lane concat is trivial); the two width taps come from a sublane roll of
    # the packed slab + a one-column zero mask (the wrap-around column is
    # exactly the column the mask zeroes, so no padded copies are needed).
    pc = jnp.concatenate([y1[0:th], y1[1:th + 1], y1[2:th + 2]],
                         axis=-1).reshape(th * w, 3 * cm)      # f32
    xcol = lax.broadcasted_iota(jnp.int32, (th, w, 1), 1).reshape(th * w, 1)

    wdt = w2_ref.dtype
    acc = jnp.dot(pc.astype(wdt), w2_ref[1],
                  preferred_element_type=jnp.float32)
    left = jnp.where(xcol == 0, 0.0, pltpu.roll(pc, shift=1, axis=0))
    acc = acc + jnp.dot(left.astype(wdt), w2_ref[0],
                        preferred_element_type=jnp.float32)
    right = jnp.where(xcol == w - 1, 0.0,
                      pltpu.roll(pc, shift=th * w - 1, axis=0))
    acc = acc + jnp.dot(right.astype(wdt), w2_ref[2],
                        preferred_element_type=jnp.float32)

    y2 = _silu(acc + b2_ref[...])                              # (th*W, C2p) f32
    if add:
        y2 = y2 + xi.reshape(th * w, c1p).astype(jnp.float32)
    o_ref[0] = y2.reshape(th, w, c2p).astype(o_ref.dtype)      # lane-dense store


# ---------------------------------------------------------------------------
# VMEM-aware tile picking + wrapper (layout glue + pallas_call plumbing)
# ---------------------------------------------------------------------------
def _vmem_capacity_bytes():
    try:
        cap = getattr(pltpu.get_tpu_info(), "vmem_capacity_bytes", None)
        if cap:
            return int(cap)
    except Exception:
        pass
    return 64 << 20   # conservative fallback (v7x per-TensorCore VMEM)


def _pick_tile_h(h, est_bytes, budget):
    """Largest divisor of H whose working set fits the VMEM budget, preferring
    >= 2 row tiles so both v7x TensorCores get work even at batch == 1."""
    divs = [d for d in range(1, h + 1) if h % d == 0]
    fit = [d for d in divs if est_bytes(d) <= budget] or [divs[0]]
    multi = [d for d in fit if d < h]
    if multi and max(multi) >= min(8, h):
        return max(multi)
    # TODO(synk): ragged (cdiv + masked last tile) row tiling for H values
    # without a usable divisor; today such H falls back to coarse tiles.
    return max(fit)


def bottleneck_forward(x_nchw, kparams, *, shortcut=True, tile_h=None):
    w1, b1, w2, b2 = (kparams["w1"], kparams["b1"],
                      kparams["w2"], kparams["b2"])
    c1 = x_nchw.shape[1]
    c2 = kparams["c2"]
    c1p, cm = w1.shape
    c2p = w2.shape[2]
    add = bool(shortcut) and (c1 == c2)

    x = jnp.transpose(x_nchw, (0, 2, 3, 1))           # NCHW -> NHWC (C on lanes)
    if c1p != c1:                                     # lane-dense channel pad
        x = jnp.pad(x, ((0, 0), (0, 0), (0, 0), (0, c1p - c1)))
    n, h, w, _ = x.shape
    ib = x.dtype.itemsize
    wb = w1.dtype.itemsize

    def est_bytes(th):   # rough per-step VMEM working set
        return (2 * th * w * c1p * ib           # pipelined x blocks (double buffered)
                + 2 * th * w * c2p * ib         # pipelined out blocks
                + 2 * w * c1p * ib              # halo scratch
                + (th + 2) * w * cm * 4         # y1 (f32)
                + 2 * th * w * 3 * cm * 4       # packed slab + one rolled copy
                + 2 * th * w * c2p * 4          # f32 acc + y2
                + (c1p * cm + 9 * cm * c2p + cm + c2p) * 4)

    cap = _vmem_capacity_bytes()
    th = int(tile_h) if tile_h is not None else _pick_tile_h(
        h, est_bytes, int(cap * 0.4))
    if h % th != 0:
        raise ValueError(f"tile_h={th} must divide H={h}")
    n_tiles = h // th
    vmem_limit = int(min(cap * 0.9, max(2 * est_bytes(th), 32 << 20)))

    cost = pl.CostEstimate(
        flops=2 * n * h * w * (c1p * cm + 9 * cm * c2p)
              + (n * h * w * c2p if add else 0),
        transcendentals=n * h * w * (cm + c2p),
        bytes_accessed=int(x.size) * ib + n * h * w * c2p * ib
                       + (c1p * cm + 9 * cm * c2p) * wb)

    kernel = functools.partial(_bottleneck_fused_kernel, add=add)

    out = pl.pallas_call(
        kernel,
        out_shape=jax.ShapeDtypeStruct((n, h, w, c2p), x.dtype),
        grid_spec=pltpu.PrefetchScalarGridSpec(
            num_scalar_prefetch=0,
            grid=(n, n_tiles),
            in_specs=[
                pl.BlockSpec((1, th, w, c1p), lambda i, j: (i, j, 0, 0)),  # x tile (pipelined)
                pl.BlockSpec(memory_space=pl.ANY),                         # x in HBM (halo DMAs)
                pl.BlockSpec((c1p, cm), lambda i, j: (0, 0)),              # w1 (BN folded)
                pl.BlockSpec((1, cm), lambda i, j: (0, 0)),                # b1
                pl.BlockSpec((3, 3 * cm, c2p), lambda i, j: (0, 0, 0)),    # w2 packed per dx
                pl.BlockSpec((1, c2p), lambda i, j: (0, 0)),               # b2
            ],
            out_specs=pl.BlockSpec((1, th, w, c2p), lambda i, j: (i, j, 0, 0)),
            scratch_shapes=[
                pltpu.VMEM((2, 1, w, c1p), x.dtype),    # top/bottom halo rows
                pltpu.SemaphoreType.DMA((2,)),
            ],
        ),
        compiler_params=pltpu.CompilerParams(
            dimension_semantics=("parallel", "parallel"),
            vmem_limit_bytes=vmem_limit),
        cost_estimate=cost,
    )(x, x, w1, b1, w2, b2)

    out = out[..., :c2]                                # strip channel padding
    return jnp.transpose(out, (0, 3, 1, 2))            # NHWC -> NCHW


# ---------------------------------------------------------------------------
# Parameter construction (torch-like raw params) and BN folding / packing
# ---------------------------------------------------------------------------
def make_params(key, c1, c2, e=0.5, eps=1e-5):
    c_ = int(c2 * e)
    ks = jax.random.split(key, 10)
    return {
        "eps": eps,
        # cv1: Conv2d(c1, c_, 1) weight, OIHW
        "w1_oihw": 0.1 * jax.random.normal(ks[0], (c_, c1, 1, 1), jnp.float32),
        "g1": 1.0 + 0.1 * jax.random.normal(ks[1], (c_,), jnp.float32),
        "beta1": 0.1 * jax.random.normal(ks[2], (c_,), jnp.float32),
        "m1": 0.1 * jax.random.normal(ks[3], (c_,), jnp.float32),
        "v1": jnp.abs(jax.random.normal(ks[4], (c_,), jnp.float32)) + 0.5,
        # cv2: Conv2d(c_, c2, 3, padding=1) weight, OIHW
        "w2_oihw": 0.1 * jax.random.normal(ks[5], (c2, c_, 3, 3), jnp.float32),
        "g2": 1.0 + 0.1 * jax.random.normal(ks[6], (c2,), jnp.float32),
        "beta2": 0.1 * jax.random.normal(ks[7], (c2,), jnp.float32),
        "m2": 0.1 * jax.random.normal(ks[8], (c2,), jnp.float32),
        "v2": jnp.abs(jax.random.normal(ks[9], (c2,), jnp.float32)) + 0.5,
    }


def fold_params(p, dtype=jnp.float32, lane=_LANE):
    """Fold BN (eval stats) into the conv weights, zero-pad channel dims to a
    lane multiple (128), and pre-pack w2 per width tap as (3*cm, c2) for
    K=3*cm matmuls.  Biases stay f32 (added on the f32 accumulator)."""
    eps = p["eps"]
    cm, c1 = p["w1_oihw"].shape[0], p["w1_oihw"].shape[1]
    c2 = p["w2_oihw"].shape[0]
    c1p, cmp_, c2p = (_round_up(c1, lane), _round_up(cm, lane),
                      _round_up(c2, lane))

    s1 = p["g1"] / jnp.sqrt(p["v1"] + eps)                            # (cm,)
    w1 = jnp.transpose(p["w1_oihw"][:, :, 0, 0], (1, 0)) * s1[None, :]
    w1p = jnp.zeros((c1p, cmp_), jnp.float32).at[:c1, :cm].set(w1)
    b1 = jnp.zeros((1, cmp_), jnp.float32).at[0, :cm].set(
        p["beta1"] - p["m1"] * s1)

    s2 = p["g2"] / jnp.sqrt(p["v2"] + eps)                            # (c2,)
    w2 = jnp.transpose(p["w2_oihw"], (2, 3, 1, 0)) * s2               # (ky,kx,ci,co)
    w2p = jnp.zeros((3, 3, cmp_, c2p), jnp.float32).at[:, :, :cm, :c2].set(w2)
    w2p = jnp.transpose(w2p, (1, 0, 2, 3)).reshape(3, 3 * cmp_, c2p)  # [kx, ky*cm+ci, co]
    b2 = jnp.zeros((1, c2p), jnp.float32).at[0, :c2].set(
        p["beta2"] - p["m2"] * s2)

    return {"w1": w1p.astype(dtype), "b1": b1,
            "w2": w2p.astype(dtype), "b2": b2,
            "c1": c1, "c2": c2, "cm": cm}


# ---------------------------------------------------------------------------
# Pure-JAX reference (raw params, explicit BN) for validation
# ---------------------------------------------------------------------------
def ref_forward(x_nchw, p, *, shortcut=True):
    eps = p["eps"]
    x = jnp.transpose(x_nchw, (0, 2, 3, 1))
    w1 = jnp.transpose(p["w1_oihw"], (2, 3, 1, 0))            # (1,1,C1,Cm)
    y = lax.conv_general_dilated(x, w1, (1, 1), "VALID",
                                 dimension_numbers=("NHWC", "HWIO", "NHWC"))
    y = (y - p["m1"]) / jnp.sqrt(p["v1"] + eps) * p["g1"] + p["beta1"]
    y = y * jax.nn.sigmoid(y)

    w2 = jnp.transpose(p["w2_oihw"], (2, 3, 1, 0))            # (3,3,Cm,C2)
    y2 = lax.conv_general_dilated(y, w2, (1, 1), ((1, 1), (1, 1)),
                                  dimension_numbers=("NHWC", "HWIO", "NHWC"))
    y2 = (y2 - p["m2"]) / jnp.sqrt(p["v2"] + eps) * p["g2"] + p["beta2"]
    y2 = y2 * jax.nn.sigmoid(y2)

    if shortcut and x.shape[-1] == y2.shape[-1]:
        y2 = y2 + x
    return jnp.transpose(y2, (0, 3, 1, 2))


if __name__ == "__main__":
    key = jax.random.PRNGKey(0)
    kx, kp = jax.random.split(key)

    c1 = c2 = 4
    N, H, W = 2, 16, 16
    x = jax.random.normal(kx, (N, c1, H, W), jnp.float32)     # NCHW, like torch

    raw = make_params(kp, c1, c2, e=0.5)
    kparams = fold_params(raw)

    # 1) shortcut path, auto tile pick (-> 2 row tiles: exercises halo DMAs,
    #    boundary masking, and the v7x two-TensorCore-friendly grid).
    out = bottleneck_forward(x, kparams, shortcut=True)
    out = jax.block_until_ready(out)
    ref = ref_forward(x, raw, shortcut=True)
    assert out.shape == (N, c2, H, W)
    err = jnp.max(jnp.abs(out - ref))
    assert jnp.allclose(out, ref, atol=2e-4, rtol=2e-4), \
        f"shortcut mismatch: max err {err}"

    # 2) no-shortcut path, single tile (whole image per grid step)
    out2 = bottleneck_forward(x, kparams, shortcut=False, tile_h=16)
    out2 = jax.block_until_ready(out2)
    ref2 = ref_forward(x, raw, shortcut=False)
    err2 = jnp.max(jnp.abs(out2 - ref2))
    assert jnp.allclose(out2, ref2, atol=2e-4, rtol=2e-4), \
        f"no-shortcut mismatch: max err {err2}"

    # 3) bf16 activations/weights with f32 accumulation (loosened tolerance)
    x_bf = x.astype(jnp.bfloat16)
    out3 = bottleneck_forward(x_bf, fold_params(raw, dtype=jnp.bfloat16),
                              shortcut=True, tile_h=8)
    out3 = jax.block_until_ready(out3)
    ref3 = ref_forward(x_bf.astype(jnp.float32), raw, shortcut=True)
    err3 = jnp.max(jnp.abs(out3.astype(jnp.float32) - ref3))
    assert jnp.allclose(out3.astype(jnp.float32), ref3, atol=5e-2, rtol=5e-2), \
        f"bf16 mismatch: max err {err3}"

    print("KERNEL_OK")
</pallas_src>

<mosaic_0001>
module attributes {stable_mosaic.version = 11 : i64} {
  func.func @_bottleneck_fused_kernel(%arg0: i32, %arg1: i32, %arg2: memref<1x8x16x128xf32, #tpu.memory_space<vmem>>, %arg3: memref<2x16x16x128xf32, #tpu.memory_space<any>>, %arg4: memref<128x128xf32, #tpu.memory_space<vmem>>, %arg5: memref<1x128xf32, #tpu.memory_space<vmem>>, %arg6: memref<3x384x128xf32, #tpu.memory_space<vmem>>, %arg7: memref<1x128xf32, #tpu.memory_space<vmem>>, %arg8: memref<1x8x16x128xf32, #tpu.memory_space<vmem>>, %arg9: memref<2x1x16x128xf32, #tpu.memory_space<vmem>>, %arg10: memref<2x!tpu.dma_semaphore, #tpu.memory_space<semaphore_mem>>) attributes {dimension_semantics = [#tpu.dimension_semantics<parallel>, #tpu.dimension_semantics<parallel>], iteration_bounds = array<i64: 2, 2>, scalar_prefetch = 0 : i64, scratch_operands = 2 : i64, tpu.core_type = #tpu.core_type<tc>, window_params = [{transform_indices = @transform_0, window_bounds = array<i64: 1, 8, 16, 128>}, {}, {pipeline_mode = #tpu.pipeline_mode<synchronous>, transform_indices = @transform_2, window_bounds = array<i64: 128, 128>}, {pipeline_mode = #tpu.pipeline_mode<synchronous>, transform_indices = @transform_3, window_bounds = array<i64: 1, 128>}, {pipeline_mode = #tpu.pipeline_mode<synchronous>, transform_indices = @transform_4, window_bounds = array<i64: 3, 384, 128>}, {pipeline_mode = #tpu.pipeline_mode<synchronous>, transform_indices = @transform_5, window_bounds = array<i64: 1, 128>}, {transform_indices = @transform_6, window_bounds = array<i64: 1, 8, 16, 128>}]} {
    %c8_i32 = arith.constant 8 : i32
    %0 = arith.muli %arg1, %c8_i32 : i32
    %c0_i32 = arith.constant 0 : i32
    %1 = arith.cmpi sgt, %arg1, %c0_i32 : i32
    %2 = arith.extui %1 : i1 to i32
    %c0_i32_0 = arith.constant 0 : i32
    %3 = arith.cmpi ne, %2, %c0_i32_0 : i32
    scf.if %3 {
      %c1_i32_53 = arith.constant 1 : i32
      %104 = arith.subi %0, %c1_i32_53 : i32
      %c0_i32_54 = arith.constant 0 : i32
      %c0_i32_55 = arith.constant 0 : i32
      %c0_i32_56 = arith.constant 0 : i32
      %c0_i32_57 = arith.constant 0 : i32
      %105 = tpu.memref_slice %arg3[%arg0, %104, %c0_i32_56, %c0_i32_57] : memref<2x16x16x128xf32, #tpu.memory_space<any>> -> memref<1x1x16x128xf32, #tpu.memory_space<any>>
      %106 = tpu.memref_squeeze %105 : memref<1x1x16x128xf32, #tpu.memory_space<any>> -> memref<1x16x128xf32, #tpu.memory_space<any>>
      %c0_i32_58 = arith.constant 0 : i32
      %c0_i32_59 = arith.constant 0 : i32
      %c0_i32_60 = arith.constant 0 : i32
      %107 = tpu.memref_slice %arg9[%c0_i32_54, %c0_i32_58, %c0_i32_59, %c0_i32_60] : memref<2x1x16x128xf32, #tpu.memory_space<vmem>> -> memref<1x1x16x128xf32, #tpu.memory_space<vmem>>
      %108 = tpu.memref_squeeze %107 : memref<1x1x16x128xf32, #tpu.memory_space<vmem>> -> memref<1x16x128xf32, #tpu.memory_space<vmem>>
      %109 = tpu.memref_slice %arg10[%c0_i32_55] : memref<2x!tpu.dma_semaphore, #tpu.memory_space<semaphore_mem>> -> memref<1x!tpu.dma_semaphore, #tpu.memory_space<semaphore_mem>>
      %110 = tpu.memref_squeeze %109 : memref<1x!tpu.dma_semaphore, #tpu.memory_space<semaphore_mem>> -> memref<!tpu.dma_semaphore, #tpu.memory_space<semaphore_mem>>
      tpu.enqueue_dma source(%106 : memref<1x16x128xf32, #tpu.memory_space<any>>) target(%108 : memref<1x16x128xf32, #tpu.memory_space<vmem>>) target_semaphore(%110 : memref<!tpu.dma_semaphore, #tpu.memory_space<semaphore_mem>>)
    } else {
    }
    %c0_i32_1 = arith.constant 0 : i32
    %4 = arith.cmpi eq, %arg1, %c0_i32_1 : i32
    %5 = arith.extui %4 : i1 to i32
    %c0_i32_2 = arith.constant 0 : i32
    %6 = arith.cmpi ne, %5, %c0_i32_2 : i32
    scf.if %6 {
      %cst_53 = arith.constant 0.000000e+00 : f32
      %104 = vector.broadcast %cst_53 : f32 to vector<1x16x128xf32>
      %c0_54 = arith.constant 0 : index
      %c0_55 = arith.constant 0 : index
      %c0_56 = arith.constant 0 : index
      %c0_57 = arith.constant 0 : index
      %105 = vector.load %arg9[%c0_54, %c0_55, %c0_56, %c0_57] : memref<2x1x16x128xf32, #tpu.memory_space<vmem>>, vector<1x1x16x128xf32>
      %106 = vector.shape_cast %105 : vector<1x1x16x128xf32> to vector<1x16x128xf32>
      %107 = vector.shape_cast %104 : vector<1x16x128xf32> to vector<1x1x16x128xf32>
      tpu.vector_store %arg9[%c0_54, %c0_55, %c0_56, %c0_57], %107 {strides = array<i32>} : memref<2x1x16x128xf32, #tpu.memory_space<vmem>>, vector<1x1x16x128xf32>,
    } else {
    }
    %c1_i32 = arith.constant 1 : i32
    %7 = arith.cmpi slt, %arg1, %c1_i32 : i32
    %8 = arith.extui %7 : i1 to i32
    %c0_i32_3 = arith.constant 0 : i32
    %9 = arith.cmpi ne, %8, %c0_i32_3 : i32
    scf.if %9 {
      %c8_i32_53 = arith.constant 8 : i32
      %104 = arith.addi %0, %c8_i32_53 : i32
      %c1_i32_54 = arith.constant 1 : i32
      %c1_i32_55 = arith.constant 1 : i32
      %c0_i32_56 = arith.constant 0 : i32
      %c0_i32_57 = arith.constant 0 : i32
      %105 = tpu.memref_slice %arg3[%arg0, %104, %c0_i32_56, %c0_i32_57] : memref<2x16x16x128xf32, #tpu.memory_space<any>> -> memref<1x1x16x128xf32, #tpu.memory_space<any>>
      %106 = tpu.memref_squeeze %105 : memref<1x1x16x128xf32, #tpu.memory_space<any>> -> memref<1x16x128xf32, #tpu.memory_space<any>>
      %c0_i32_58 = arith.constant 0 : i32
      %c0_i32_59 = arith.constant 0 : i32
      %c0_i32_60 = arith.constant 0 : i32
      %107 = tpu.memref_slice %arg9[%c1_i32_54, %c0_i32_58, %c0_i32_59, %c0_i32_60] : memref<2x1x16x128xf32, #tpu.memory_space<vmem>> -> memref<1x1x16x128xf32, #tpu.memory_space<vmem>>
      %108 = tpu.memref_squeeze %107 : memref<1x1x16x128xf32, #tpu.memory_space<vmem>> -> memref<1x16x128xf32, #tpu.memory_space<vmem>>
      %109 = tpu.memref_slice %arg10[%c1_i32_55] : memref<2x!tpu.dma_semaphore, #tpu.memory_space<semaphore_mem>> -> memref<1x!tpu.dma_semaphore, #tpu.memory_space<semaphore_mem>>
      %110 = tpu.memref_squeeze %109 : memref<1x!tpu.dma_semaphore, #tpu.memory_space<semaphore_mem>> -> memref<!tpu.dma_semaphore, #tpu.memory_space<semaphore_mem>>
      tpu.enqueue_dma source(%106 : memref<1x16x128xf32, #tpu.memory_space<any>>) target(%108 : memref<1x16x128xf32, #tpu.memory_space<vmem>>) target_semaphore(%110 : memref<!tpu.dma_semaphore, #tpu.memory_space<semaphore_mem>>)
    } else {
    }
    %c1_i32_4 = arith.constant 1 : i32
    %10 = arith.cmpi eq, %arg1, %c1_i32_4 : i32
    %11 = arith.extui %10 : i1 to i32
    %c0_i32_5 = arith.constant 0 : i32
    %12 = arith.cmpi ne, %11, %c0_i32_5 : i32
    scf.if %12 {
      %cst_53 = arith.constant 0.000000e+00 : f32
      %104 = vector.broadcast %cst_53 : f32 to vector<1x16x128xf32>
      %c1_54 = arith.constant 1 : index
      %c0_55 = arith.constant 0 : index
      %c0_56 = arith.constant 0 : index
      %c0_57 = arith.constant 0 : index
      %105 = vector.load %arg9[%c1_54, %c0_55, %c0_56, %c0_57] : memref<2x1x16x128xf32, #tpu.memory_space<vmem>>, vector<1x1x16x128xf32>
      %106 = vector.shape_cast %105 : vector<1x1x16x128xf32> to vector<1x16x128xf32>
      %107 = vector.shape_cast %104 : vector<1x16x128xf32> to vector<1x1x16x128xf32>
      tpu.vector_store %arg9[%c1_54, %c0_55, %c0_56, %c0_57], %107 {strides = array<i32>} : memref<2x1x16x128xf32, #tpu.memory_space<vmem>>, vector<1x1x16x128xf32>,
    } else {
    }
    %c0 = arith.constant 0 : index
    %c0_6 = arith.constant 0 : index
    %c0_7 = arith.constant 0 : index
    %c0_8 = arith.constant 0 : index
    %13 = vector.load %arg2[%c0, %c0_6, %c0_7, %c0_8] : memref<1x8x16x128xf32, #tpu.memory_space<vmem>>, vector<1x8x16x128xf32>
    %14 = vector.shape_cast %13 : vector<1x8x16x128xf32> to vector<8x16x128xf32>
    %15 = vector.shape_cast %14 : vector<8x16x128xf32> to vector<128x128xf32>
    %c0_9 = arith.constant 0 : index
    %c0_10 = arith.constant 0 : index
    %16 = vector.load %arg4[%c0_9, %c0_10] : memref<128x128xf32, #tpu.memory_space<vmem>>, vector<128x128xf32>
    %cst = arith.constant dense<0.000000e+00> : vector<128x128xf32>
    %17 = tpu.matmul %15, %16, %cst {dimension_numbers = #tpu.dot_dimension_numbers<[1], [0], [0], [1], [0, 0, 1, 1], [], []>} : vector<128x128xf32>, vector<128x128xf32>, vector<128x128xf32> -> vector<128x128xf32>
    %c0_11 = arith.constant 0 : index
    %c0_12 = arith.constant 0 : index
    %18 = vector.load %arg5[%c0_11, %c0_12] : memref<1x128xf32, #tpu.memory_space<vmem>>, vector<1x128xf32>
    %19 = vector.broadcast %18 : vector<1x128xf32> to vector<128x128xf32>
    %20 = arith.addf %17, %19 : vector<128x128xf32>
    %21 = arith.negf %20 : vector<128x128xf32>
    %22 = math.exp %21 : vector<128x128xf32>
    %cst_13 = arith.constant 1.000000e+00 : f32
    %23 = vector.broadcast %cst_13 : f32 to vector<128x128xf32>
    %24 = arith.addf %23, %22 : vector<128x128xf32>
    %25 = arith.divf %23, %24 : vector<128x128xf32>
    %26 = arith.mulf %20, %25 : vector<128x128xf32>
    %27 = vector.shape_cast %26 : vector<128x128xf32> to vector<8x16x128xf32>
    %c0_i32_14 = arith.constant 0 : i32
    %28 = arith.cmpi sgt, %arg1, %c0_i32_14 : i32
    %29 = arith.extui %28 : i1 to i32
    %c0_i32_15 = arith.constant 0 : i32
    %30 = arith.cmpi ne, %29, %c0_i32_15 : i32
    scf.if %30 {
      %c1_i32_53 = arith.constant 1 : i32
      %104 = arith.subi %0, %c1_i32_53 : i32
      %c0_i32_54 = arith.constant 0 : i32
      %c0_i32_55 = arith.constant 0 : i32
      %c0_i32_56 = arith.constant 0 : i32
      %c0_i32_57 = arith.constant 0 : i32
      %105 = tpu.memref_slice %arg3[%arg0, %104, %c0_i32_56, %c0_i32_57] : memref<2x16x16x128xf32, #tpu.memory_space<any>> -> memref<1x1x16x128xf32, #tpu.memory_space<any>>
      %106 = tpu.memref_squeeze %105 : memref<1x1x16x128xf32, #tpu.memory_space<any>> -> memref<1x16x128xf32, #tpu.memory_space<any>>
      %c0_i32_58 = arith.constant 0 : i32
      %c0_i32_59 = arith.constant 0 : i32
      %c0_i32_60 = arith.constant 0 : i32
      %107 = tpu.memref_slice %arg9[%c0_i32_54, %c0_i32_58, %c0_i32_59, %c0_i32_60] : memref<2x1x16x128xf32, #tpu.memory_space<vmem>> -> memref<1x1x16x128xf32, #tpu.memory_space<vmem>>
      %108 = tpu.memref_squeeze %107 : memref<1x1x16x128xf32, #tpu.memory_space<vmem>> -> memref<1x16x128xf32, #tpu.memory_space<vmem>>
      %109 = tpu.memref_slice %arg10[%c0_i32_55] : memref<2x!tpu.dma_semaphore, #tpu.memory_space<semaphore_mem>> -> memref<1x!tpu.dma_semaphore, #tpu.memory_space<semaphore_mem>>
      %110 = tpu.memref_squeeze %109 : memref<1x!tpu.dma_semaphore, #tpu.memory_space<semaphore_mem>> -> memref<!tpu.dma_semaphore, #tpu.memory_space<semaphore_mem>>
      tpu.wait_dma2 semaphore(%110 : memref<!tpu.dma_semaphore, #tpu.memory_space<semaphore_mem>>) src(%106 : memref<1x16x128xf32, #tpu.memory_space<any>>) dst(%108 : memref<1x16x128xf32, #tpu.memory_space<vmem>>)
    } else {
    }
    %c1_i32_16 = arith.constant 1 : i32
    %31 = arith.cmpi slt, %arg1, %c1_i32_16 : i32
    %32 = arith.extui %31 : i1 to i32
    %c0_i32_17 = arith.constant 0 : i32
    %33 = arith.cmpi ne, %32, %c0_i32_17 : i32
    scf.if %33 {
      %c8_i32_53 = arith.constant 8 : i32
      %104 = arith.addi %0, %c8_i32_53 : i32
      %c1_i32_54 = arith.constant 1 : i32
      %c1_i32_55 = arith.constant 1 : i32
      %c0_i32_56 = arith.constant 0 : i32
      %c0_i32_57 = arith.constant 0 : i32
      %105 = tpu.memref_slice %arg3[%arg0, %104, %c0_i32_56, %c0_i32_57] : memref<2x16x16x128xf32, #tpu.memory_space<any>> -> memref<1x1x16x128xf32, #tpu.memory_space<any>>
      %106 = tpu.memref_squeeze %105 : memref<1x1x16x128xf32, #tpu.memory_space<any>> -> memref<1x16x128xf32, #tpu.memory_space<any>>
      %c0_i32_58 = arith.constant 0 : i32
      %c0_i32_59 = arith.constant 0 : i32
      %c0_i32_60 = arith.constant 0 : i32
      %107 = tpu.memref_slice %arg9[%c1_i32_54, %c0_i32_58, %c0_i32_59, %c0_i32_60] : memref<2x1x16x128xf32, #tpu.memory_space<vmem>> -> memref<1x1x16x128xf32, #tpu.memory_space<vmem>>
      %108 = tpu.memref_squeeze %107 : memref<1x1x16x128xf32, #tpu.memory_space<vmem>> -> memref<1x16x128xf32, #tpu.memory_space<vmem>>
      %109 = tpu.memref_slice %arg10[%c1_i32_55] : memref<2x!tpu.dma_semaphore, #tpu.memory_space<semaphore_mem>> -> memref<1x!tpu.dma_semaphore, #tpu.memory_space<semaphore_mem>>
      %110 = tpu.memref_squeeze %109 : memref<1x!tpu.dma_semaphore, #tpu.memory_space<semaphore_mem>> -> memref<!tpu.dma_semaphore, #tpu.memory_space<semaphore_mem>>
      tpu.wait_dma2 semaphore(%110 : memref<!tpu.dma_semaphore, #tpu.memory_space<semaphore_mem>>) src(%106 : memref<1x16x128xf32, #tpu.memory_space<any>>) dst(%108 : memref<1x16x128xf32, #tpu.memory_space<vmem>>)
    } else {
    }
    %c0_18 = arith.constant 0 : index
    %c0_19 = arith.constant 0 : index
    %c0_20 = arith.constant 0 : index
    %c0_21 = arith.constant 0 : index
    %34 = vector.load %arg9[%c0_18, %c0_19, %c0_20, %c0_21] : memref<2x1x16x128xf32, #tpu.memory_space<vmem>>, vector<2x1x16x128xf32>
    %35 = vector.shape_cast %34 : vector<2x1x16x128xf32> to vector<32x128xf32>
    %c0_22 = arith.constant 0 : index
    %c0_23 = arith.constant 0 : index
    %36 = vector.load %arg4[%c0_22, %c0_23] : memref<128x128xf32, #tpu.memory_space<vmem>>, vector<128x128xf32>
    %cst_24 = arith.constant dense<0.000000e+00> : vector<32x128xf32>
    %37 = tpu.matmul %35, %36, %cst_24 {dimension_numbers = #tpu.dot_dimension_numbers<[1], [0], [0], [1], [0, 0, 1, 1], [], []>} : vector<32x128xf32>, vector<128x128xf32>, vector<32x128xf32> -> vector<32x128xf32>
    %c0_25 = arith.constant 0 : index
    %c0_26 = arith.constant 0 : index
    %38 = vector.load %arg5[%c0_25, %c0_26] : memref<1x128xf32, #tpu.memory_space<vmem>>, vector<1x128xf32>
    %39 = vector.broadcast %38 : vector<1x128xf32> to vector<32x128xf32>
    %40 = arith.addf %37, %39 : vector<32x128xf32>
    %41 = arith.negf %40 : vector<32x128xf32>
    %42 = math.exp %41 : vector<32x128xf32>
    %cst_27 = arith.constant 1.000000e+00 : f32
    %43 = vector.broadcast %cst_27 : f32 to vector<32x128xf32>
    %44 = arith.addf %43, %42 : vector<32x128xf32>
    %45 = arith.divf %43, %44 : vector<32x128xf32>
    %46 = arith.mulf %40, %45 : vector<32x128xf32>
    %47 = vector.shape_cast %46 : vector<32x128xf32> to vector<2x16x128xf32>
    %c0_i32_28 = arith.constant 0 : i32
    %48 = arith.cmpi sgt, %arg1, %c0_i32_28 : i32
    %49 = vector.extract_strided_slice %47 {offsets = [0, 0, 0], sizes = [1, 16, 128], strides = [1, 1, 1]} : vector<2x16x128xf32> to vector<1x16x128xf32>
    %cst_29 = arith.constant 0.000000e+00 : f32
    %50 = vector.broadcast %cst_29 : f32 to vector<1x16x128xf32>
    %51 = arith.select %48, %49, %50 : vector<1x16x128xf32>
    %c1_i32_30 = arith.constant 1 : i32
    %52 = arith.cmpi slt, %arg1, %c1_i32_30 : i32
    %53 = vector.extract_strided_slice %47 {offsets = [1, 0, 0], sizes = [1, 16, 128], strides = [1, 1, 1]} : vector<2x16x128xf32> to vector<1x16x128xf32>
    %cst_31 = arith.constant 0.000000e+00 : f32
    %54 = vector.broadcast %cst_31 : f32 to vector<1x16x128xf32>
    %55 = arith.select %52, %53, %54 : vector<1x16x128xf32>
    %56 = tpu.concatenate %51, %27, %55 in 0 : vector<1x16x128xf32>, vector<8x16x128xf32>, vector<1x16x128xf32> -> vector<10x16x128xf32>
    %57 = vector.extract_strided_slice %56 {offsets = [0, 0, 0], sizes = [8, 16, 128], strides = [1, 1, 1]} : vector<10x16x128xf32> to vector<8x16x128xf32>
    %58 = vector.extract_strided_slice %56 {offsets = [1, 0, 0], sizes = [8, 16, 128], strides = [1, 1, 1]} : vector<10x16x128xf32> to vector<8x16x128xf32>
    %59 = vector.extract_strided_slice %56 {offsets = [2, 0, 0], sizes = [8, 16, 128], strides = [1, 1, 1]} : vector<10x16x128xf32> to vector<8x16x128xf32>
    %60 = tpu.concatenate %57, %58, %59 in 2 : vector<8x16x128xf32>, vector<8x16x128xf32>, vector<8x16x128xf32> -> vector<8x16x384xf32>
    %61 = vector.shape_cast %60 : vector<8x16x384xf32> to vector<128x384xf32>
    %62 = tpu.iota {dimensions = array<i32: 1>} : vector<8x16x1xi32>
    %63 = vector.shape_cast %62 : vector<8x16x1xi32> to vector<128x1xi32>
    %c1 = arith.constant 1 : index
    %c0_32 = arith.constant 0 : index
    %c0_33 = arith.constant 0 : index
    %64 = vector.load %arg6[%c1, %c0_32, %c0_33] : memref<3x384x128xf32, #tpu.memory_space<vmem>>, vector<1x384x128xf32>
    %65 = vector.shape_cast %64 : vector<1x384x128xf32> to vector<384x128xf32>
    %cst_34 = arith.constant dense<0.000000e+00> : vector<128x128xf32>
    %66 = tpu.matmul %61, %65, %cst_34 {dimension_numbers = #tpu.dot_dimension_numbers<[1], [0], [0], [1], [0, 0, 1, 1], [], []>} : vector<128x384xf32>, vector<384x128xf32>, vector<128x128xf32> -> vector<128x128xf32>
    %c0_i32_35 = arith.constant 0 : i32
    %67 = vector.broadcast %c0_i32_35 : i32 to vector<128x1xi32>
    %68 = arith.cmpi eq, %63, %67 : vector<128x1xi32>
    %c1_i32_36 = arith.constant 1 : i32
    %69 = tpu.dynamic_rotate %61 by %c1_i32_36 dim 0 : vector<128x384xf32>, i32 -> vector<128x384xf32>
    %cst_37 = arith.constant 0.000000e+00 : f32
    %70 = vector.shape_cast %68 : vector<128x1xi1> to vector<128x1xi1>
    %71 = vector.broadcast %70 : vector<128x1xi1> to vector<128x384xi1>
    %72 = vector.broadcast %cst_37 : f32 to vector<128x384xf32>
    %73 = arith.select %71, %72, %69 : vector<128x384xi1>, vector<128x384xf32>
    %c0_38 = arith.constant 0 : index
    %c0_39 = arith.constant 0 : index
    %c0_40 = arith.constant 0 : index
    %74 = vector.load %arg6[%c0_38, %c0_39, %c0_40] : memref<3x384x128xf32, #tpu.memory_space<vmem>>, vector<1x384x128xf32>
    %75 = vector.shape_cast %74 : vector<1x384x128xf32> to vector<384x128xf32>
    %cst_41 = arith.constant dense<0.000000e+00> : vector<128x128xf32>
    %76 = tpu.matmul %73, %75, %cst_41 {dimension_numbers = #tpu.dot_dimension_numbers<[1], [0], [0], [1], [0, 0, 1, 1], [], []>} : vector<128x384xf32>, vector<384x128xf32>, vector<128x128xf32> -> vector<128x128xf32>
    %77 = arith.addf %66, %76 : vector<128x128xf32>
    %c15_i32 = arith.constant 15 : i32
    %78 = vector.broadcast %c15_i32 : i32 to vector<128x1xi32>
    %79 = arith.cmpi eq, %63, %78 : vector<128x1xi32>
    %c127_i32 = arith.constant 127 : i32
    %80 = tpu.dynamic_rotate %61 by %c127_i32 dim 0 : vector<128x384xf32>, i32 -> vector<128x384xf32>
    %cst_42 = arith.constant 0.000000e+00 : f32
    %81 = vector.shape_cast %79 : vector<128x1xi1> to vector<128x1xi1>
    %82 = vector.broadcast %81 : vector<128x1xi1> to vector<128x384xi1>
    %83 = vector.broadcast %cst_42 : f32 to vector<128x384xf32>
    %84 = arith.select %82, %83, %80 : vector<128x384xi1>, vector<128x384xf32>
    %c2 = arith.constant 2 : index
    %c0_43 = arith.constant 0 : index
    %c0_44 = arith.constant 0 : index
    %85 = vector.load %arg6[%c2, %c0_43, %c0_44] : memref<3x384x128xf32, #tpu.memory_space<vmem>>, vector<1x384x128xf32>
    %86 = vector.shape_cast %85 : vector<1x384x128xf32> to vector<384x128xf32>
    %cst_45 = arith.constant dense<0.000000e+00> : vector<128x128xf32>
    %87 = tpu.matmul %84, %86, %cst_45 {dimension_numbers = #tpu.dot_dimension_numbers<[1], [0], [0], [1], [0, 0, 1, 1], [], []>} : vector<128x384xf32>, vector<384x128xf32>, vector<128x128xf32> -> vector<128x128xf32>
    %88 = arith.addf %77, %87 : vector<128x128xf32>
    %c0_46 = arith.constant 0 : index
    %c0_47 = arith.constant 0 : index
    %89 = vector.load %arg7[%c0_46, %c0_47] : memref<1x128xf32, #tpu.memory_space<vmem>>, vector<1x128xf32>
    %90 = vector.broadcast %89 : vector<1x128xf32> to vector<128x128xf32>
    %91 = arith.addf %88, %90 : vector<128x128xf32>
    %92 = arith.negf %91 : vector<128x128xf32>
    %93 = math.exp %92 : vector<128x128xf32>
    %cst_48 = arith.constant 1.000000e+00 : f32
    %94 = vector.broadcast %cst_48 : f32 to vector<128x128xf32>
    %95 = arith.addf %94, %93 : vector<128x128xf32>
    %96 = arith.divf %94, %95 : vector<128x128xf32>
    %97 = arith.mulf %91, %96 : vector<128x128xf32>
    %98 = vector.shape_cast %14 : vector<8x16x128xf32> to vector<128x128xf32>
    %99 = arith.addf %97, %98 : vector<128x128xf32>
    %100 = vector.shape_cast %99 : vector<128x128xf32> to vector<8x16x128xf32>
    %c0_49 = arith.constant 0 : index
    %c0_50 = arith.constant 0 : index
    %c0_51 = arith.constant 0 : index
    %c0_52 = arith.constant 0 : index
    %101 = vector.load %arg8[%c0_49, %c0_50, %c0_51, %c0_52] : memref<1x8x16x128xf32, #tpu.memory_space<vmem>>, vector<1x8x16x128xf32>
    %102 = vector.shape_cast %101 : vector<1x8x16x128xf32> to vector<8x16x128xf32>
    %103 = vector.shape_cast %100 : vector<8x16x128xf32> to vector<1x8x16x128xf32>
    tpu.vector_store %arg8[%c0_49, %c0_50, %c0_51, %c0_52], %103 {strides = array<i32>} : memref<1x8x16x128xf32, #tpu.memory_space<vmem>>, vector<1x8x16x128xf32>,
    return
  }
  func.func @transform_0(%arg0: i32, %arg1: i32) -> (i32, i32, i32, i32) {
    %c0_i32 = arith.constant 0 : i32
    %c0_i32_0 = arith.constant 0 : i32
    %c0_i32_1 = arith.constant 0 : i32
    return %arg0, %arg1, %c0_i32, %c0_i32_0 : i32, i32, i32, i32
  }
  func.func @transform_2(%arg0: i32, %arg1: i32) -> (i32, i32) {
    %c0_i32 = arith.constant 0 : i32
    %c0_i32_0 = arith.constant 0 : i32
    %c0_i32_1 = arith.constant 0 : i32
    return %c0_i32, %c0_i32_0 : i32, i32
  }
  func.func @transform_3(%arg0: i32, %arg1: i32) -> (i32, i32) {
    %c0_i32 = arith.constant 0 : i32
    %c0_i32_0 = arith.constant 0 : i32
    %c0_i32_1 = arith.constant 0 : i32
    return %c0_i32, %c0_i32_0 : i32, i32
  }
  func.func @transform_4(%arg0: i32, %arg1: i32) -> (i32, i32, i32) {
    %c0_i32 = arith.constant 0 : i32
    %c0_i32_0 = arith.constant 0 : i32
    %c0_i32_1 = arith.constant 0 : i32
    %c0_i32_2 = arith.constant 0 : i32
    return %c0_i32, %c0_i32_0, %c0_i32_1 : i32, i32, i32
  }
  func.func @transform_5(%arg0: i32, %arg1: i32) -> (i32, i32) {
    %c0_i32 = arith.constant 0 : i32
    %c0_i32_0 = arith.constant 0 : i32
    %c0_i32_1 = arith.constant 0 : i32
    return %c0_i32, %c0_i32_0 : i32, i32
  }
  func.func @transform_6(%arg0: i32, %arg1: i32) -> (i32, i32, i32, i32) {
    %c0_i32 = arith.constant 0 : i32
    %c0_i32_0 = arith.constant 0 : i32
    %c0_i32_1 = arith.constant 0 : i32
    return %arg0, %arg1, %c0_i32, %c0_i32_0 : i32, i32, i32, i32
  }
}

</mosaic_0001>

<llo_original>
// kernel: tpu_custom_call.1
$region0: #{tpu_custom_call.1}
  #allocation0 [shape = 'u32[]', space=smem, size = 0x4, offset = 0x4, fixed_abs, tag = 'smem constant byte address 0x4 - core index']
  #allocation1 [shape = 'u32[72,128]{1,0:T(1,128)}', space=vmem, size = 0x9000, scoped, tag = 'internal scratch']
  #allocation2 [shape = 'f32[2,1,16,128]{3,2,1,0:T(8,128)}', space=vmem, size = 0x4000, scoped, tag = 'scratch operand']
  #allocation3 [shape = 's32[2]{0}', space=sflag, size = 0x8, scoped, tag = 'scratch operand']
  #allocation11 [shape = 's32[]', space=sflag, size = 0x4, offset = 0, fixed_abs, tag = 'sflag constant byte address 0x0 - dummy sync flag']
  #allocation12 [shape = 's32[]', space=sflag, size = 0x4, offset = 0, fixed_abs, tag = 'sflag constant byte address 0x0 - dummy sync flag']
  #allocation13 [shape = 'u32[]', space=smem, size = 0x4, offset = 0x44, fixed_abs, tag = 'smem constant byte address 0x44 - assertion arg 0']
  #allocation14 [shape = 'u32[]', space=smem, size = 0x4, offset = 0x48, fixed_abs, tag = 'smem constant byte address 0x48 - assertion arg 1']
  #allocation15 [shape = 's32[]', space=sflag, size = 0x4, offset = 0, fixed_abs, tag = 'sflag constant byte address 0x0 - dummy sync flag']
  #allocation16 [shape = 's32[]', space=sflag, size = 0x4, offset = 0, fixed_abs, tag = 'sflag constant byte address 0x0 - dummy sync flag']
  %s0 = inlined_call_operand.hbm [shape: f32[2,16,16,128], index: 0, kind: input, shape index: {}]
  %s1 = inlined_call_operand.hbm [shape: f32[2,16,16,128], index: 1, kind: input, shape index: {}]
  %s2 = inlined_call_operand.hbm [shape: f32[128,128], index: 2, kind: input, shape index: {}]
  %s3 = inlined_call_operand.vmem [shape: f32[1,128], index: 3, kind: input, shape index: {}]
  %s4 = inlined_call_operand.hbm [shape: f32[3,384,128], index: 4, kind: input, shape index: {}]
  %s5 = inlined_call_operand.vmem [shape: f32[1,128], index: 5, kind: input, shape index: {}]
  %s6 = inlined_call_operand.hbm [shape: f32[2,16,16,128], index: 6, kind: output, shape index: {}]
  %s7 = sld [smem:[#allocation0]]
  $region97: #{tpu_custom_call.1} parent=0
    _
  %s9 = ssub.s32 1, %s7
  %s10 = scalar_select 0, %s9, %s7
  $region1: #{tpu_custom_call.1} parent=0
    #allocation4 [shape = 'u8[131072]{0}', space=vmem, size = 0x20000, scoped, tag = 'input window, operand 0']
    #allocation5 [shape = 's32[2]{0}', space=sflag, size = 0x8, scoped, tag = 'scoped memory for tpu_custom_call.1']
    #allocation6 [shape = 's32[2]{0}', space=sflag, size = 0x8, scoped, tag = 'scoped memory for tpu_custom_call.1']
    #allocation7 [shape = 'u8[65536]{0}', space=vmem, size = 0x10000, scoped, tag = 'input window, operand 2, single buffered']
    #allocation8 [shape = 's32[1]{0}', space=sflag, size = 0x4, scoped, tag = 'scoped memory for tpu_custom_call.1']
    #allocation9 [shape = 'u8[589824]{0}', space=vmem, size = 0x90000, scoped, tag = 'input window, operand 4, single buffered']
    #allocation10 [shape = 'u8[131072]{0}', space=vmem, size = 0x20000, scoped, tag = 'output window, operand 0']
    %11 = vsyncpa [#allocation5], 0
    %s12 = scalar_lea.sflag [#allocation5], 1
    %13 = vsyncpa %s12, 0
    %14 = vsyncpa [#allocation8], 0
    %15 = vsyncpa [#allocation6], 0
    %s16 = scalar_lea.sflag [#allocation6], 1
    %17 = vsyncpa %s16, 0
    loop: start=0, step=1, limit=6
    $region2: #{tpu_custom_call.1} parent=1 // loop_pre_header
      _
    $region3: #{tpu_custom_call.1} parent=1 // loop_header
      %s19 = sphi 0, %s23
      %p20 = scmp.ge.s32.totalorder %s19, 6
      %s26 = sphi 0, %s38
      %s27 = sphi 0, %s34
      %s28 = sphi 0, %s26
      %s29 = sphi 0, %s27
      %s30 = sphi 0, %s28
      %s31 = sphi 0, %s29
      %s43 = sphi 0, %s45
      %s46 = sphi 0, %s43
      %s47 = sphi 0, %s46
      %s63 = sphi 0, %s47
      %s67 = sphi 0, %s67
      %s69 = sphi 0, %s67
      %s70 = sphi 0, %s69
      %s84 = sphi 0, %s70
      %s88 = sphi 0, %s88
      %s90 = sphi 0, %s88
      %s91 = sphi 0, %s90
      %s105 = sphi 0, %s91
      %s109 = sphi 0, %s109
      %s111 = sphi 0, %s109
      %s112 = sphi 0, %s111
      %s126 = sphi 0, %s112
      %s130 = sphi 0, %s130
      %s132 = sphi 0, %s130
      %s133 = sphi 0, %s132
      %s147 = sphi 0, %s133
      %s155 = sphi 0, %s157
      %s158 = sphi 0, %s155
      %s159 = sphi 0, %s158
      %s175 = sphi 0, %s159
    $region4: #{tpu_custom_call.1} parent=1 // loop_header_branch
      %22 = sbr.rel (%p20) target = $region8
    $region5: #{tpu_custom_call.1} parent=1 // loop_body
      %s24 = ssub.s32 %s19, 1
      %s25 = ssub.s32 %s19, 2
      %s32 = sadd.s32 1, %s27
      %p33 = scmp.ge.s32.totalorder %s32, 2
      %s34 = scalar_select %p33, 0, %s32
      %s35 = sadd.s32 1, %s26
      %s36 = scalar_select %p33, %s35, %s26
      %p37 = scmp.ge.s32.totalorder %s36, 2
      %s38 = scalar_select %p37, 0, %s36
      %s39 = ssub.s32 %s26, %s38
      %s40 = ssub.s32 %s27, %s34
      %s41 = sor.u32 %s39, %s40
      %p42 = scmp.eq.s32.totalorder %s41, 0
      %s44 = sadd.s32 %s43, 1
      %s45 = scalar_select %p42, %s43, %s44
      %p48 = pneg %p42
      %p49 = scmp.eq.s32.totalorder %s19, 3
      %p50 = por %p48, %p49
      %p51 = scmp.ne.s32.totalorder %s43, %s46
      %p52 = scmp.eq.s32.totalorder %s19, 0
      %p53 = por %p51, %p52
      %p54 = scmp.ne.s32.totalorder %s43, %s46
      %p55 = scmp.eq.s32.totalorder %s24, 3
      %p56 = por %p54, %p55
      %p57 = scmp.ne.s32.totalorder %s46, %s47
      %p58 = scmp.eq.s32.totalorder %s24, 0
      %p59 = por %p57, %p58
      %p60 = scmp.ne.s32.totalorder %s46, %s47
      %p61 = scmp.eq.s32.totalorder %s25, 3
      %p62 = por %p60, %p61
      %p64 = scmp.ne.s32.totalorder %s47, %s63
      %p65 = scmp.eq.s32.totalorder %s25, 0
      %p66 = por %p64, %p65
      %s68 = sadd.s32 %s67, 1
      %p71 = scmp.eq.s32.totalorder %s19, 3
      %p72 = scmp.ne.s32.totalorder %s67, %s69
      %p73 = scmp.eq.s32.totalorder %s19, 0
      %p74 = por %p72, %p73
      %p75 = scmp.ne.s32.totalorder %s67, %s69
      %p76 = scmp.eq.s32.totalorder %s24, 3
      %p77 = por %p75, %p76
      %p78 = scmp.ne.s32.totalorder %s69, %s70
      %p79 = scmp.eq.s32.totalorder %s24, 0
      %p80 = por %p78, %p79
      %p81 = scmp.ne.s32.totalorder %s69, %s70
      %p82 = scmp.eq.s32.totalorder %s25, 3
      %p83 = por %p81, %p82
      %p85 = scmp.ne.s32.totalorder %s70, %s84
      %p86 = scmp.eq.s32.totalorder %s25, 0
      %p87 = por %p85, %p86
      %s89 = sadd.s32 %s88, 1
      %p92 = scmp.eq.s32.totalorder %s19, 3
      %p93 = scmp.ne.s32.totalorder %s88, %s90
      %p94 = scmp.eq.s32.totalorder %s19, 0
      %p95 = por %p93, %p94
      %p96 = scmp.ne.s32.totalorder %s88, %s90
      %p97 = scmp.eq.s32.totalorder %s24, 3
      %p98 = por %p96, %p97
      %p99 = scmp.ne.s32.totalorder %s90, %s91
      %p100 = scmp.eq.s32.totalorder %s24, 0
      %p101 = por %p99, %p100
      %p102 = scmp.ne.s32.totalorder %s90, %s91
      %p103 = scmp.eq.s32.totalorder %s25, 3
      %p104 = por %p102, %p103
      %p106 = scmp.ne.s32.totalorder %s91, %s105
      %p107 = scmp.eq.s32.totalorder %s25, 0
      %p108 = por %p106, %p107
      %s110 = sadd.s32 %s109, 1
      %p113 = scmp.eq.s32.totalorder %s19, 3
      %p114 = scmp.ne.s32.totalorder %s109, %s111
      %p115 = scmp.eq.s32.totalorder %s19, 0
      %p116 = por %p114, %p115
      %p117 = scmp.ne.s32.totalorder %s109, %s111
      %p118 = scmp.eq.s32.totalorder %s24, 3
      %p119 = por %p117, %p118
      %p120 = scmp.ne.s32.totalorder %s111, %s112
      %p121 = scmp.eq.s32.totalorder %s24, 0
      %p122 = por %p120, %p121
      %p123 = scmp.ne.s32.totalorder %s111, %s112
      %p124 = scmp.eq.s32.totalorder %s25, 3
      %p125 = por %p123, %p124
      %p127 = scmp.ne.s32.totalorder %s112, %s126
      %p128 = scmp.eq.s32.totalorder %s25, 0
      %p129 = por %p127, %p128
      %s131 = sadd.s32 %s130, 1
      %p134 = scmp.eq.s32.totalorder %s19, 3
      %p135 = scmp.ne.s32.totalorder %s130, %s132
      %p136 = scmp.eq.s32.totalorder %s19, 0
      %p137 = por %p135, %p136
      %p138 = scmp.ne.s32.totalorder %s130, %s132
      %p139 = scmp.eq.s32.totalorder %s24, 3
      %p140 = por %p138, %p139
      %p141 = scmp.ne.s32.totalorder %s132, %s133
      %p142 = scmp.eq.s32.totalorder %s24, 0
      %p143 = por %p141, %p142
      %p144 = scmp.ne.s32.totalorder %s132, %s133
      %p145 = scmp.eq.s32.totalorder %s25, 3
      %p146 = por %p144, %p145
      %p148 = scmp.ne.s32.totalorder %s133, %s147
      %p149 = scmp.eq.s32.totalorder %s25, 0
      %p150 = por %p148, %p149
      %s151 = ssub.s32 %s26, %s38
      %s152 = ssub.s32 %s27, %s34
      %s153 = sor.u32 %s151, %s152
      %p154 = scmp.eq.s32.totalorder %s153, 0
      %s156 = sadd.s32 %s155, 1
      %s157 = scalar_select %p154, %s155, %s156
      %p160 = pneg %p154
      %p161 = scmp.eq.s32.totalorder %s19, 3
      %p162 = por %p160, %p161
      %p163 = scmp.ne.s32.totalorder %s155, %s158
      %p164 = scmp.eq.s32.totalorder %s19, 0
      %p165 = por %p163, %p164
      %p166 = scmp.ne.s32.totalorder %s155, %s158
      %p167 = scmp.eq.s32.totalorder %s24, 3
      %p168 = por %p166, %p167
      %p169 = scmp.ne.s32.totalorder %s158, %s159
      %p170 = scmp.eq.s32.totalorder %s24, 0
      %p171 = por %p169, %p170
      %p172 = scmp.ne.s32.totalorder %s158, %s159
      %p173 = scmp.eq.s32.totalorder %s25, 3
      %p174 = por %p172, %p173
      %p176 = scmp.ne.s32.totalorder %s159, %s175
      %p177 = scmp.eq.s32.totalorder %s25, 0
      %p178 = por %p176, %p177
      %p179 = scmp.le.s32.totalorder 1, %s19
      %p180 = scmp.lt.s32.totalorder %s19, 5
      %p181 = pnand %p179, %p180
      %p182 = pneg %p181
      // Predicated region
      $region9: #{tpu_custom_call.1} parent=5 // pred_check
        _
      $region10: #{tpu_custom_call.1} parent=5 // pred_check_branch
        %184 = sbr.rel (%p181) target = $region12
      $region11: #{tpu_custom_call.1} parent=5 // pred_region
        %s185 = ssub.s32 %s19, 1
        // Predicated region
        $region13: #{tpu_custom_call.1} parent=11 // pred_check
          %p186 = pneg %p80
        $region14: #{tpu_custom_call.1} parent=11 // pred_check_branch
          %188 = sbr.rel (%p186) target = $region16
        $region15: #{tpu_custom_call.1} parent=11 // pred_region
          %190 = vsyncadd [#allocation8], 0
          %s191 = sshll.u32 %s2, 4
          %s192 = int_to_ptr.hbm [resolvable:$true] %s191
          %s193 = sshll.u32 [#allocation7], 4
          %s194 = int_to_ptr.vmem [resolvable:$true] %s193
          %199 = dma.hbm_to_vmem [thread:$0]  %s192, 2048, %s194, [#allocation8], 128, 128, 8
        $region16: #{tpu_custom_call.1} parent=11 // pred_fallthru
          _
        // Predicated region
        $region17: #{tpu_custom_call.1} parent=11 // pred_check
          %p200 = pneg %p101
        $region18: #{tpu_custom_call.1} parent=11 // pred_check_branch
          %202 = sbr.rel (%p200) target = $region20
        $region19: #{tpu_custom_call.1} parent=11 // pred_region
          _
        $region20: #{tpu_custom_call.1} parent=11 // pred_fallthru
          _
        // Predicated region
        $region21: #{tpu_custom_call.1} parent=11 // pred_check
          %p203 = pneg %p122
        $region22: #{tpu_custom_call.1} parent=11 // pred_check_branch
          %205 = sbr.rel (%p203) target = $region24
        $region23: #{tpu_custom_call.1} parent=11 // pred_region
          %207 = vsyncadd [#allocation8], 0
          %s208 = sshll.u32 %s4, 4
          %s209 = int_to_ptr.hbm [resolvable:$true] %s208
          %s210 = sshll.u32 [#allocation9], 4
          %s211 = int_to_ptr.vmem [resolvable:$true] %s210
          %216 = dma.hbm_to_vmem [thread:$0]  %s209, 18432, %s211, [#allocation8], 128, 128, 8
        $region24: #{tpu_custom_call.1} parent=11 // pred_fallthru
          _
        // Predicated region
        $region25: #{tpu_custom_call.1} parent=11 // pred_check
          %p217 = pneg %p143
        $region26: #{tpu_custom_call.1} parent=11 // pred_check_branch
          %219 = sbr.rel (%p217) target = $region28
        $region27: #{tpu_custom_call.1} parent=11 // pred_region
          _
        $region28: #{tpu_custom_call.1} parent=11 // pred_fallthru
          _
      $region12: #{tpu_custom_call.1} parent=5 // pred_fallthru
        _
      %p220 = scmp.lt.s32.totalorder %s19, 4
      // Predicated region
      $region29: #{tpu_custom_call.1} parent=5 // pred_check
        %p221 = pneg %p220
      $region30: #{tpu_custom_call.1} parent=5 // pred_check_branch
        %223 = sbr.rel (%p221) target = $region32
      $region31: #{tpu_custom_call.1} parent=5 // pred_region
        // Predicated region
        $region33: #{tpu_custom_call.1} parent=31 // pred_check
          %p224 = pneg %p53
        $region34: #{tpu_custom_call.1} parent=31 // pred_check_branch
          %226 = sbr.rel (%p224) target = $region36
        $region35: #{tpu_custom_call.1} parent=31 // pred_region
          %s227 = sand.u32 %s43, 1
          %s228 = scalar_lea.sflag [#allocation5], %s227
          %s229 = sand.u32 %s43, 1
          %s230 = smul.addr %s229, 128
          %s231 = scalar_lea.vmem [#allocation4], %s230
          %s232 = smul.u32 8, %s27
          %234 = vsyncadd %s228, 0
          %s235 = smul.addr %s232, 2
          %s236 = smul.addr %s26, 32
          %s237 = sadd.s32 %s235, %s236
          %s238 = smul.addr %s237, 8
          %s239 = scalar_lea.hbm %s0, %s238
          %s240 = sshll.u32 %s239, 4
          %s241 = int_to_ptr.hbm [resolvable:$true] %s240
          %s242 = sshll.u32 %s231, 4
          %s243 = int_to_ptr.vmem [resolvable:$true] %s242
          %248 = dma.hbm_to_vmem [thread:$0]  %s241, 2048, %s243, %s228, 128, 128, 8
        $region36: #{tpu_custom_call.1} parent=31 // pred_fallthru
          _
      $region32: #{tpu_custom_call.1} parent=5 // pred_fallthru
        _
      %p249 = scmp.le.s32.totalorder 1, %s19
      %p250 = scmp.lt.s32.totalorder %s19, 5
      %p251 = pnand %p249, %p250
      %p252 = pneg %p251
      // Predicated region
      $region37: #{tpu_custom_call.1} parent=5 // pred_check
        _
      $region38: #{tpu_custom_call.1} parent=5 // pred_check_branch
        %254 = sbr.rel (%p251) target = $region40
      $region39: #{tpu_custom_call.1} parent=5 // pred_region
        %s255 = ssub.s32 %s19, 1
        %s256 = sand.u32 %s46, 1
        %s257 = scalar_lea.sflag [#allocation5], %s256
        %s258 = sand.u32 %s46, 1
        %s259 = smul.addr %s258, 128
        %s260 = scalar_lea.vmem [#allocation4], %s259
        // Predicated region
        $region41: #{tpu_custom_call.1} parent=39 // pred_check
          %p261 = pneg %p59
        $region42: #{tpu_custom_call.1} parent=39 // pred_check_branch
          %263 = sbr.rel (%p261) target = $region44
        $region43: #{tpu_custom_call.1} parent=39 // pred_region
          %265 = dma.done %s257, 2048
        $region44: #{tpu_custom_call.1} parent=39 // pred_fallthru
          _
        // Predicated region
        $region45: #{tpu_custom_call.1} parent=39 // pred_check
          %p266 = pneg %p80
        $region46: #{tpu_custom_call.1} parent=39 // pred_check_branch
          %268 = sbr.rel (%p266) target = $region48
        $region47: #{tpu_custom_call.1} parent=39 // pred_region
          %270 = dma.done [#allocation8], 2048
        $region48: #{tpu_custom_call.1} parent=39 // pred_fallthru
          _
        // Predicated region
        $region49: #{tpu_custom_call.1} parent=39 // pred_check
          %p271 = pneg %p122
        $region50: #{tpu_custom_call.1} parent=39 // pred_check_branch
          %273 = sbr.rel (%p271) target = $region52
        $region51: #{tpu_custom_call.1} parent=39 // pred_region
          %275 = dma.done [#allocation8], 18432
        $region52: #{tpu_custom_call.1} parent=39 // pred_fallthru
          _
        %s276 = sand.u32 %s46, 1
        %s277 = scalar_lea.sflag [#allocation5], %s276
        %s278 = sand.u32 %s46, 1
        %s279 = smul.addr %s278, 128
        %s280 = scalar_lea.vmem [#allocation4], %s279
        %p281 = pneg %p59
        %p282 = pneg %p56
        %p283 = pneg %p80
        %p284 = pneg %p77
        %p285 = pneg %p101
        %p286 = pneg %p98
        %p287 = pneg %p122
        %p288 = pneg %p119
        %p289 = pneg %p143
        %p290 = pneg %p140
        %p291 = pneg %p171
        %p292 = pneg %p168
        %s293 = sand.u32 %s158, 1
        %s294 = scalar_lea.sflag [#allocation6], %s293
        %s295 = sand.u32 %s158, 1
        %s296 = smul.addr %s295, 128
        %s297 = scalar_lea.vmem [#allocation10], %s296
        %s298 = smul.u32 8, %s29
        %s299 = smul.u32 8, %s29
        %s300 = smul.u32 %s29, 8
        %p301 = scmp.gt.s32.totalorder %s29, 0
        // Predicated region
        $region53: #{tpu_custom_call.1} parent=39 // pred_check
          %p302 = pneg %p301
        $region54: #{tpu_custom_call.1} parent=39 // pred_check_branch
          %304 = sbr.rel (%p302) target = $region56
        $region55: #{tpu_custom_call.1} parent=39 // pred_region
          %s305 = ssub.s32 %s300, 1
          %s306 = smul.u32 %s305, 16
          %s307 = smul.u32 %s28, 256
          %s308 = sadd.s32 %s306, %s307
          %s309 = scalar_lea.hbm %s1, %s308
          // Predicated region
          $region57: #{tpu_custom_call.1} parent=55 // pred_check
            _
          $region58: #{tpu_custom_call.1} parent=55 // pred_check_branch
            %311 = sbr.rel target = $region60
          $region59: #{tpu_custom_call.1} parent=55 // pred_region
            %312 = sst [smem:[#allocation13]] [#allocation12]
            %313 = sst [smem:[#allocation14]] [#allocation11]
          $region60: #{tpu_custom_call.1} parent=55 // pred_fallthru
            _
          %315 = shalt.err (0)
          %s317 = sshll.u32 %s309, 4
          %s318 = int_to_ptr.hbm [resolvable:$true] %s317
          %s319 = sshll.u32 [#allocation2], 4
          %s320 = int_to_ptr.vmem [resolvable:$true] %s319
          %322 = dma.hbm_to_vmem [thread:$0]  %s318, 256, %s320, [#allocation3]
        $region56: #{tpu_custom_call.1} parent=39 // pred_fallthru
          _
        %p323 = scmp.eq.s32.totalorder %s29, 0
        // Predicated region
        $region61: #{tpu_custom_call.1} parent=39 // pred_check
          %p324 = pneg %p323
        $region62: #{tpu_custom_call.1} parent=39 // pred_check_branch
          %326 = sbr.rel (%p324) target = $region64
        $region63: #{tpu_custom_call.1} parent=39 // pred_region
          %327 = vst [vmem:[#allocation2] sm:$0xff] 0.0
          %328 = vst [vmem:[#allocation2 + $0x8] sm:$0xff] 0.0
        $region64: #{tpu_custom_call.1} parent=39 // pred_fallthru
          _
        %p329 = scmp.lt.s32.totalorder %s29, 1
        // Predicated region
        $region65: #{tpu_custom_call.1} parent=39 // pred_check
          %p330 = pneg %p329
        $region66: #{tpu_custom_call.1} parent=39 // pred_check_branch
          %332 = sbr.rel (%p330) target = $region68
        $region67: #{tpu_custom_call.1} parent=39 // pred_region
          %s333 = sadd.s32 %s300, 8
          %s334 = smul.u32 %s333, 16
          %s335 = smul.u32 %s28, 256
          %s336 = sadd.s32 %s334, %s335
          %s337 = scalar_lea.hbm %s1, %s336
          %s338 = scalar_lea.vmem [#allocation2], 16
          %s339 = scalar_lea.sflag [#allocation3], 1
          // Predicated region
          $region69: #{tpu_custom_call.1} parent=67 // pred_check
            _
          $region70: #{tpu_custom_call.1} parent=67 // pred_check_branch
            %341 = sbr.rel target = $region72
          $region71: #{tpu_custom_call.1} parent=67 // pred_region
            %342 = sst [smem:[#allocation13]] [#allocation16]
            %343 = sst [smem:[#allocation14]] [#allocation15]
          $region72: #{tpu_custom_call.1} parent=67 // pred_fallthru
            _
          %345 = shalt.err (0)
          %s347 = sshll.u32 %s337, 4
          %s348 = int_to_ptr.hbm [resolvable:$true] %s347
          %s349 = sshll.u32 %s338, 4
          %s350 = int_to_ptr.vmem [resolvable:$true] %s349
          %352 = dma.hbm_to_vmem [thread:$0]  %s348, 256, %s350, %s339
        $region68: #{tpu_custom_call.1} parent=39 // pred_fallthru
          _
        %p353 = scmp.eq.s32.totalorder %s29, 1
        // Predicated region
        $region73: #{tpu_custom_call.1} parent=39 // pred_check
          %p354 = pneg %p353
        $region74: #{tpu_custom_call.1} parent=39 // pred_check_branch
          %356 = sbr.rel (%p354) target = $region76
        $region75: #{tpu_custom_call.1} parent=39 // pred_region
          %s357 = scalar_lea.vmem [#allocation2], 16
          %358 = vst [vmem:[%s357] sm:$0xff] 0.0
          %359 = vst [vmem:[%s357 + $0x8] sm:$0xff] 0.0
        $region76: #{tpu_custom_call.1} parent=39 // pred_fallthru
          _
        %v360 = vld [vmem:[%s260] sm:$0xff]
        %v361 = vld [vmem:[%s260 + $0x8] sm:$0xff]
        %v362 = vld [vmem:[%s260 + $0x10] sm:$0xff]
        %v363 = vld [vmem:[%s260 + $0x18] sm:$0xff]
        %v364 = vld [vmem:[%s260 + $0x20] sm:$0xff]
        %v365 = vld [vmem:[%s260 + $0x28] sm:$0xff]
        %v366 = vld [vmem:[%s260 + $0x30] sm:$0xff]
        %v367 = vld [vmem:[%s260 + $0x38] sm:$0xff]
        %v368 = vld [vmem:[%s260 + $0x40] sm:$0xff]
        %v369 = vld [vmem:[%s260 + $0x48] sm:$0xff]
        %v370 = vld [vmem:[%s260 + $0x50] sm:$0xff]
        %v371 = vld [vmem:[%s260 + $0x58] sm:$0xff]
        %v372 = vld [vmem:[%s260 + $0x60] sm:$0xff]
        %v373 = vld [vmem:[%s260 + $0x68] sm:$0xff]
        %v374 = vld [vmem:[%s260 + $0x70] sm:$0xff]
        %v375 = vld [vmem:[%s260 + $0x78] sm:$0xff]
        %v376 = vld [vmem:[#allocation7] sm:$0xff]
        %v377 = vld [vmem:[#allocation7 + $0x8] sm:$0xff]
        %v378 = vld [vmem:[#allocation7 + $0x10] sm:$0xff]
        %v379 = vld [vmem:[#allocation7 + $0x18] sm:$0xff]
        %v380 = vld [vmem:[#allocation7 + $0x20] sm:$0xff]
        %v381 = vld [vmem:[#allocation7 + $0x28] sm:$0xff]
        %v382 = vld [vmem:[#allocation7 + $0x30] sm:$0xff]
        %v383 = vld [vmem:[#allocation7 + $0x38] sm:$0xff]
        %v384 = vld [vmem:[#allocation7 + $0x40] sm:$0xff]
        %v385 = vld [vmem:[#allocation7 + $0x48] sm:$0xff]
        %v386 = vld [vmem:[#allocation7 + $0x50] sm:$0xff]
        %v387 = vld [vmem:[#allocation7 + $0x58] sm:$0xff]
        %v388 = vld [vmem:[#allocation7 + $0x60] sm:$0xff]
        %v389 = vld [vmem:[#allocation7 + $0x68] sm:$0xff]
        %v390 = vld [vmem:[#allocation7 + $0x70] sm:$0xff]
        %v391 = vld [vmem:[#allocation7 + $0x78] sm:$0xff]
        %v392 = vld [vmem:[%s3] sm:$0x1]
        %v394 = vperm.slane %v392, 0
        %396 = vmatpush.msra.mxu0 %v391
        %397 = vmatpush.msra.mxu0 %v390
        %398 = vmatpush.msra.mxu0 %v389
        %399 = vmatpush.msra.mxu0 %v388
        %400 = vmatpush.msra.mxu0 %v387
        %401 = vmatpush.msra.mxu0 %v386
        %402 = vmatpush.msra.mxu0 %v385
        %403 = vmatpush.msra.mxu0 %v384
        %404 = vmatpush.msra.mxu0 %v383
        %405 = vmatpush.msra.mxu0 %v382
        %406 = vmatpush.msra.mxu0 %v381
        %407 = vmatpush.msra.mxu0 %v380
        %408 = vmatpush.msra.mxu0 %v379
        %409 = vmatpush.msra.mxu0 %v378
        %410 = vmatpush.msra.mxu0 %v377
        %411 = vmatpush.msra.mxu0 %v376
        %412 = vmatmul.f32.gmra.mxu0 %v360
        %v413 = vpop.f32.mrf.mxu0
        %v414 = vadd.f32 %v394, %v413
        %415 = vmatmul.f32.gmra.mxu0 %v361
        %v416 = vpop.f32.mrf.mxu0
        %v417 = vadd.f32 %v394, %v416
        %418 = vmatmul.f32.gmra.mxu0 %v362
        %v419 = vpop.f32.mrf.mxu0
        %v420 = vadd.f32 %v394, %v419
        %421 = vmatmul.f32.gmra.mxu0 %v363
        %v422 = vpop.f32.mrf.mxu0
        %v423 = vadd.f32 %v394, %v422
        %424 = vmatmul.f32.gmra.mxu0 %v364
        %v425 = vpop.f32.mrf.mxu0
        %v426 = vadd.f32 %v394, %v425
        %427 = vmatmul.f32.gmra.mxu0 %v365
        %v428 = vpop.f32.mrf.mxu0
        %v429 = vadd.f32 %v394, %v428
        %430 = vmatmul.f32.gmra.mxu0 %v366
        %v431 = vpop.f32.mrf.mxu0
        %v432 = vadd.f32 %v394, %v431
        %433 = vmatmul.f32.gmra.mxu0 %v367
        %v434 = vpop.f32.mrf.mxu0
        %v435 = vadd.f32 %v394, %v434
        %436 = vmatmul.f32.gmra.mxu0 %v368
        %v437 = vpop.f32.mrf.mxu0
        %v438 = vadd.f32 %v394, %v437
        %439 = vmatmul.f32.gmra.mxu0 %v369
        %v440 = vpop.f32.mrf.mxu0
        %v441 = vadd.f32 %v394, %v440
        %442 = vmatmul.f32.gmra.mxu0 %v370
        %v443 = vpop.f32.mrf.mxu0
        %v444 = vadd.f32 %v394, %v443
        %445 = vmatmul.f32.gmra.mxu0 %v371
        %v446 = vpop.f32.mrf.mxu0
        %v447 = vadd.f32 %v394, %v446
        %448 = vmatmul.f32.gmra.mxu0 %v372
        %v449 = vpop.f32.mrf.mxu0
        %v450 = vadd.f32 %v394, %v449
        %451 = vmatmul.f32.gmra.mxu0 %v373
        %v452 = vpop.f32.mrf.mxu0
        %v453 = vadd.f32 %v394, %v452
        %454 = vmatmul.f32.gmra.mxu0 %v374
        %v455 = vpop.f32.mrf.mxu0
        %v456 = vadd.f32 %v394, %v455
        %457 = vmatmul.f32.gmra.mxu0 %v375
        %v458 = vpop.f32.mrf.mxu0
        %v459 = vadd.f32 %v394, %v458
        %460 = vdwg.mxu0
        %v461 = vxor.u32 %v414, 2147483648
        %v462 = vxor.u32 %v417, 2147483648
        %v463 = vxor.u32 %v420, 2147483648
        %v464 = vxor.u32 %v423, 2147483648
        %v465 = vxor.u32 %v426, 2147483648
        %v466 = vxor.u32 %v429, 2147483648
        %v467 = vxor.u32 %v432, 2147483648
        %v468 = vxor.u32 %v435, 2147483648
        %v469 = vxor.u32 %v438, 2147483648
        %v470 = vxor.u32 %v441, 2147483648
        %v471 = vxor.u32 %v444, 2147483648
        %v472 = vxor.u32 %v447, 2147483648
        %v473 = vxor.u32 %v450, 2147483648
        %v474 = vxor.u32 %v453, 2147483648
        %v475 = vxor.u32 %v456, 2147483648
        %v476 = vxor.u32 %v459, 2147483648
        %v477 = vmul.f32 %v461, 1.442695
        %v478 = vpow.pop %v477
        %v479 = vmul.f32 %v462, 1.442695
        %v480 = vpow.pop %v479
        %v481 = vmul.f32 %v463, 1.442695
        %v482 = vpow.pop %v481
        %v483 = vmul.f32 %v464, 1.442695
        %v484 = vpow.pop %v483
        %v485 = vmul.f32 %v465, 1.442695
        %v486 = vpow.pop %v485
        %v487 = vmul.f32 %v466, 1.442695
        %v488 = vpow.pop %v487
        %v489 = vmul.f32 %v467, 1.442695
        %v490 = vpow.pop %v489
        %v491 = vmul.f32 %v468, 1.442695
        %v492 = vpow.pop %v491
        %v493 = vmul.f32 %v469, 1.442695
        %v494 = vpow.pop %v493
        %v495 = vmul.f32 %v470, 1.442695
        %v496 = vpow.pop %v495
        %v497 = vmul.f32 %v471, 1.442695
        %v498 = vpow.pop %v497
        %v499 = vmul.f32 %v472, 1.442695
        %v500 = vpow.pop %v499
        %v501 = vmul.f32 %v473, 1.442695
        %v502 = vpow.pop %v501
        %v503 = vmul.f32 %v474, 1.442695
        %v504 = vpow.pop %v503
        %v505 = vmul.f32 %v475, 1.442695
        %v506 = vpow.pop %v505
        %v507 = vmul.f32 %v476, 1.442695
        %v508 = vpow.pop %v507
        %v509 = vadd.f32 %v478, 1.0
        %v510 = vadd.f32 %v480, 1.0
        %v511 = vadd.f32 %v482, 1.0
        %v512 = vadd.f32 %v484, 1.0
        %v513 = vadd.f32 %v486, 1.0
        %v514 = vadd.f32 %v488, 1.0
        %v515 = vadd.f32 %v490, 1.0
        %v516 = vadd.f32 %v492, 1.0
        %v517 = vadd.f32 %v494, 1.0
        %v518 = vadd.f32 %v496, 1.0
        %v519 = vadd.f32 %v498, 1.0
        %v520 = vadd.f32 %v500, 1.0
        %v521 = vadd.f32 %v502, 1.0
        %v522 = vadd.f32 %v504, 1.0
        %v523 = vadd.f32 %v506, 1.0
        %v524 = vadd.f32 %v508, 1.0
        %v525 = vrcp.pop %v509
        %v526 = vmul.f32 %v509, %v525
        %v527 = vsub.f32 1.0, %v526
        %v528 = vmul.f32 %v525, %v527
        %v529 = vadd.f32 %v525, %v528
        %vm530 = vweird.f32 %v509
        %vm531 = vweird.f32 %v525
        %vm532 = vmor %vm530, %vm531
        %v533 = vsel %vm532, %v525, %v529
        %v534 = vand.u32 2147483647, %v509
        %vm535 = vcmp.eq.f32.partialorder %v534, 8.507059e+37
        %v536 = vand.u32 %v509, 2147483648
        %v537 = vor.u32 1.1754944e-38, %v536
        %v538 = vsel %vm535, %v537, %v533
        %v539 = vmul.f32 1.0, %v538
        %v540 = vrcp.pop %v510
        %v541 = vmul.f32 %v510, %v540
        %v542 = vsub.f32 1.0, %v541
        %v543 = vmul.f32 %v540, %v542
        %v544 = vadd.f32 %v540, %v543
        %vm545 = vweird.f32 %v510
        %vm546 = vweird.f32 %v540
        %vm547 = vmor %vm545, %vm546
        %v548 = vsel %vm547, %v540, %v544
        %v549 = vand.u32 2147483647, %v510
        %vm550 = vcmp.eq.f32.partialorder %v549, 8.507059e+37
        %v551 = vand.u32 %v510, 2147483648
        %v552 = vor.u32 1.1754944e-38, %v551
        %v553 = vsel %vm550, %v552, %v548
        %v554 = vmul.f32 1.0, %v553
        %v555 = vrcp.pop %v511
        %v556 = vmul.f32 %v511, %v555
        %v557 = vsub.f32 1.0, %v556
        %v558 = vmul.f32 %v555, %v557
        %v559 = vadd.f32 %v555, %v558
        %vm560 = vweird.f32 %v511
        %vm561 = vweird.f32 %v555
        %vm562 = vmor %vm560, %vm561
        %v563 = vsel %vm562, %v555, %v559
        %v564 = vand.u32 2147483647, %v511
        %vm565 = vcmp.eq.f32.partialorder %v564, 8.507059e+37
        %v566 = vand.u32 %v511, 2147483648
        %v567 = vor.u32 1.1754944e-38, %v566
        %v568 = vsel %vm565, %v567, %v563
        %v569 = vmul.f32 1.0, %v568
        %v570 = vrcp.pop %v512
        %v571 = vmul.f32 %v512, %v570
        %v572 = vsub.f32 1.0, %v571
        %v573 = vmul.f32 %v570, %v572
        %v574 = vadd.f32 %v570, %v573
        %vm575 = vweird.f32 %v512
        %vm576 = vweird.f32 %v570
        %vm577 = vmor %vm575, %vm576
        %v578 = vsel %vm577, %v570, %v574
        %v579 = vand.u32 2147483647, %v512
        %vm580 = vcmp.eq.f32.partialorder %v579, 8.507059e+37
        %v581 = vand.u32 %v512, 2147483648
        %v582 = vor.u32 1.1754944e-38, %v581
        %v583 = vsel %vm580, %v582, %v578
        %v584 = vmul.f32 1.0, %v583
        %v585 = vrcp.pop %v513
        %v586 = vmul.f32 %v513, %v585
        %v587 = vsub.f32 1.0, %v586
        %v588 = vmul.f32 %v585, %v587
        %v589 = vadd.f32 %v585, %v588
        %vm590 = vweird.f32 %v513
        %vm591 = vweird.f32 %v585
        %vm592 = vmor %vm590, %vm591
        %v593 = vsel %vm592, %v585, %v589
        %v594 = vand.u32 2147483647, %v513
        %vm595 = vcmp.eq.f32.partialorder %v594, 8.507059e+37
        %v596 = vand.u32 %v513, 2147483648
        %v597 = vor.u32 1.1754944e-38, %v596
        %v598 = vsel %vm595, %v597, %v593
        %v599 = vmul.f32 1.0, %v598
        %v600 = vrcp.pop %v514
        %v601 = vmul.f32 %v514, %v600
        %v602 = vsub.f32 1.0, %v601
        %v603 = vmul.f32 %v600, %v602
        %v604 = vadd.f32 %v600, %v603
        %vm605 = vweird.f32 %v514
        %vm606 = vweird.f32 %v600
        %vm607 = vmor %vm605, %vm606
        %v608 = vsel %vm607, %v600, %v604
        %v609 = vand.u32 2147483647, %v514
        %vm610 = vcmp.eq.f32.partialorder %v609, 8.507059e+37
        %v611 = vand.u32 %v514, 2147483648
        %v612 = vor.u32 1.1754944e-38, %v611
        %v613 = vsel %vm610, %v612, %v608
        %v614 = vmul.f32 1.0, %v613
        %v615 = vrcp.pop %v515
        %v616 = vmul.f32 %v515, %v615
        %v617 = vsub.f32 1.0, %v616
        %v618 = vmul.f32 %v615, %v617
        %v619 = vadd.f32 %v615, %v618
        %vm620 = vweird.f32 %v515
        %vm621 = vweird.f32 %v615
        %vm622 = vmor %vm620, %vm621
        %v623 = vsel %vm622, %v615, %v619
        %v624 = vand.u32 2147483647, %v515
        %vm625 = vcmp.eq.f32.partialorder %v624, 8.507059e+37
        %v626 = vand.u32 %v515, 2147483648
        %v627 = vor.u32 1.1754944e-38, %v626
        %v628 = vsel %vm625, %v627, %v623
        %v629 = vmul.f32 1.0, %v628
        %v630 = vrcp.pop %v516
        %v631 = vmul.f32 %v516, %v630
        %v632 = vsub.f32 1.0, %v631
        %v633 = vmul.f32 %v630, %v632
        %v634 = vadd.f32 %v630, %v633
        %vm635 = vweird.f32 %v516
        %vm636 = vweird.f32 %v630
        %vm637 = vmor %vm635, %vm636
        %v638 = vsel %vm637, %v630, %v634
        %v639 = vand.u32 2147483647, %v516
        %vm640 = vcmp.eq.f32.partialorder %v639, 8.507059e+37
        %v641 = vand.u32 %v516, 2147483648
        %v642 = vor.u32 1.1754944e-38, %v641
        %v643 = vsel %vm640, %v642, %v638
        %v644 = vmul.f32 1.0, %v643
        %v645 = vrcp.pop %v517
        %v646 = vmul.f32 %v517, %v645
        %v647 = vsub.f32 1.0, %v646
        %v648 = vmul.f32 %v645, %v647
        %v649 = vadd.f32 %v645, %v648
        %vm650 = vweird.f32 %v517
        %vm651 = vweird.f32 %v645
        %vm652 = vmor %vm650, %vm651
        %v653 = vsel %vm652, %v645, %v649
        %v654 = vand.u32 2147483647, %v517
        %vm655 = vcmp.eq.f32.partialorder %v654, 8.507059e+37
        %v656 = vand.u32 %v517, 2147483648
        %v657 = vor.u32 1.1754944e-38, %v656
        %v658 = vsel %vm655, %v657, %v653
        %v659 = vmul.f32 1.0, %v658
        %v660 = vrcp.pop %v518
        %v661 = vmul.f32 %v518, %v660
        %v662 = vsub.f32 1.0, %v661
        %v663 = vmul.f32 %v660, %v662
        %v664 = vadd.f32 %v660, %v663
        %vm665 = vweird.f32 %v518
        %vm666 = vweird.f32 %v660
        %vm667 = vmor %vm665, %vm666
        %v668 = vsel %vm667, %v660, %v664
        %v669 = vand.u32 2147483647, %v518
        %vm670 = vcmp.eq.f32.partialorder %v669, 8.507059e+37
        %v671 = vand.u32 %v518, 2147483648
        %v672 = vor.u32 1.1754944e-38, %v671
        %v673 = vsel %vm670, %v672, %v668
        %v674 = vmul.f32 1.0, %v673
        %v675 = vrcp.pop %v519
        %v676 = vmul.f32 %v519, %v675
        %v677 = vsub.f32 1.0, %v676
        %v678 = vmul.f32 %v675, %v677
        %v679 = vadd.f32 %v675, %v678
        %vm680 = vweird.f32 %v519
        %vm681 = vweird.f32 %v675
        %vm682 = vmor %vm680, %vm681
        %v683 = vsel %vm682, %v675, %v679
        %v684 = vand.u32 2147483647, %v519
        %vm685 = vcmp.eq.f32.partialorder %v684, 8.507059e+37
        %v686 = vand.u32 %v519, 2147483648
        %v687 = vor.u32 1.1754944e-38, %v686
        %v688 = vsel %vm685, %v687, %v683
        %v689 = vmul.f32 1.0, %v688
        %v690 = vrcp.pop %v520
        %v691 = vmul.f32 %v520, %v690
        %v692 = vsub.f32 1.0, %v691
        %v693 = vmul.f32 %v690, %v692
        %v694 = vadd.f32 %v690, %v693
        %vm695 = vweird.f32 %v520
        %vm696 = vweird.f32 %v690
        %vm697 = vmor %vm695, %vm696
        %v698 = vsel %vm697, %v690, %v694
        %v699 = vand.u32 2147483647, %v520
        %vm700 = vcmp.eq.f32.partialorder %v699, 8.507059e+37
        %v701 = vand.u32 %v520, 2147483648
        %v702 = vor.u32 1.1754944e-38, %v701
        %v703 = vsel %vm700, %v702, %v698
        %v704 = vmul.f32 1.0, %v703
        %v705 = vrcp.pop %v521
        %v706 = vmul.f32 %v521, %v705
        %v707 = vsub.f32 1.0, %v706
        %v708 = vmul.f32 %v705, %v707
        %v709 = vadd.f32 %v705, %v708
        %vm710 = vweird.f32 %v521
        %vm711 = vweird.f32 %v705
        %vm712 = vmor %vm710, %vm711
        %v713 = vsel %vm712, %v705, %v709
        %v714 = vand.u32 2147483647, %v521
        %vm715 = vcmp.eq.f32.partialorder %v714, 8.507059e+37
        %v716 = vand.u32 %v521, 2147483648
        %v717 = vor.u32 1.1754944e-38, %v716
        %v718 = vsel %vm715, %v717, %v713
        %v719 = vmul.f32 1.0, %v718
        %v720 = vrcp.pop %v522
        %v721 = vmul.f32 %v522, %v720
        %v722 = vsub.f32 1.0, %v721
        %v723 = vmul.f32 %v720, %v722
        %v724 = vadd.f32 %v720, %v723
        %vm725 = vweird.f32 %v522
        %vm726 = vweird.f32 %v720
        %vm727 = vmor %vm725, %vm726
        %v728 = vsel %vm727, %v720, %v724
        %v729 = vand.u32 2147483647, %v522
        %vm730 = vcmp.eq.f32.partialorder %v729, 8.507059e+37
        %v731 = vand.u32 %v522, 2147483648
        %v732 = vor.u32 1.1754944e-38, %v731
        %v733 = vsel %vm730, %v732, %v728
        %v734 = vmul.f32 1.0, %v733
        %v735 = vrcp.pop %v523
        %v736 = vmul.f32 %v523, %v735
        %v737 = vsub.f32 1.0, %v736
        %v738 = vmul.f32 %v735, %v737
        %v739 = vadd.f32 %v735, %v738
        %vm740 = vweird.f32 %v523
        %vm741 = vweird.f32 %v735
        %vm742 = vmor %vm740, %vm741
        %v743 = vsel %vm742, %v735, %v739
        %v744 = vand.u32 2147483647, %v523
        %vm745 = vcmp.eq.f32.partialorder %v744, 8.507059e+37
        %v746 = vand.u32 %v523, 2147483648
        %v747 = vor.u32 1.1754944e-38, %v746
        %v748 = vsel %vm745, %v747, %v743
        %v749 = vmul.f32 1.0, %v748
        %v750 = vrcp.pop %v524
        %v751 = vmul.f32 %v524, %v750
        %v752 = vsub.f32 1.0, %v751
        %v753 = vmul.f32 %v750, %v752
        %v754 = vadd.f32 %v750, %v753
        %vm755 = vweird.f32 %v524
        %vm756 = vweird.f32 %v750
        %vm757 = vmor %vm755, %vm756
        %v758 = vsel %vm757, %v750, %v754
        %v759 = vand.u32 2147483647, %v524
        %vm760 = vcmp.eq.f32.partialorder %v759, 8.507059e+37
        %v761 = vand.u32 %v524, 2147483648
        %v762 = vor.u32 1.1754944e-38, %v761
        %v763 = vsel %vm760, %v762, %v758
        %v764 = vmul.f32 1.0, %v763
        %v765 = vmul.f32 %v414, %v539
        %v766 = vmul.f32 %v417, %v554
        %v767 = vmul.f32 %v420, %v569
        %v768 = vmul.f32 %v423, %v584
        %v769 = vmul.f32 %v426, %v599
        %v770 = vmul.f32 %v429, %v614
        %v771 = vmul.f32 %v432, %v629
        %v772 = vmul.f32 %v435, %v644
        %v773 = vmul.f32 %v438, %v659
        %v774 = vmul.f32 %v441, %v674
        %v775 = vmul.f32 %v444, %v689
        %v776 = vmul.f32 %v447, %v704
        %v777 = vmul.f32 %v450, %v719
        %v778 = vmul.f32 %v453, %v734
        %v779 = vmul.f32 %v456, %v749
        %v780 = vmul.f32 %v459, %v764
        // Predicated region
        $region77: #{tpu_custom_call.1} parent=39 // pred_check
          %p781 = pneg %p301
        $region78: #{tpu_custom_call.1} parent=39 // pred_check_branch
          %783 = sbr.rel (%p781) target = $region80
        $region79: #{tpu_custom_call.1} parent=39 // pred_region
          %s784 = smul.u32 1, 16
          %s785 = smul.u32 %s784, 1
          %s786 = sshll.u32 %s785, 4
          %787 = dma.done [#allocation3], %s786
        $region80: #{tpu_custom_call.1} parent=39 // pred_fallthru
          _
        // Predicated region
        $region81: #{tpu_custom_call.1} parent=39 // pred_check
          %p788 = pneg %p329
        $region82: #{tpu_custom_call.1} parent=39 // pred_check_branch
          %790 = sbr.rel (%p788) target = $region84
        $region83: #{tpu_custom_call.1} parent=39 // pred_region
          %s791 = scalar_lea.sflag [#allocation3], 1
          %s792 = smul.u32 1, 16
          %s793 = smul.u32 %s792, 1
          %s794 = sshll.u32 %s793, 4
          %795 = dma.done %s791, %s794
        $region84: #{tpu_custom_call.1} parent=39 // pred_fallthru
          _
        %v796 = vld [vmem:[#allocation2] sm:$0xff]
        %v797 = vld [vmem:[#allocation2 + $0x8] sm:$0xff]
        %v798 = vld [vmem:[#allocation2 + $0x10] sm:$0xff]
        %v799 = vld [vmem:[#allocation2 + $0x18] sm:$0xff]
        %v800 = vld [vmem:[#allocation7] sm:$0xff]
        %v801 = vld [vmem:[#allocation7 + $0x8] sm:$0xff]
        %v802 = vld [vmem:[#allocation7 + $0x10] sm:$0xff]
        %v803 = vld [vmem:[#allocation7 + $0x18] sm:$0xff]
        %v804 = vld [vmem:[#allocation7 + $0x20] sm:$0xff]
        %v805 = vld [vmem:[#allocation7 + $0x28] sm:$0xff]
        %v806 = vld [vmem:[#allocation7 + $0x30] sm:$0xff]
        %v807 = vld [vmem:[#allocation7 + $0x38] sm:$0xff]
        %v808 = vld [vmem:[#allocation7 + $0x40] sm:$0xff]
        %v809 = vld [vmem:[#allocation7 + $0x48] sm:$0xff]
        %v810 = vld [vmem:[#allocation7 + $0x50] sm:$0xff]
        %v811 = vld [vmem:[#allocation7 + $0x58] sm:$0xff]
        %v812 = vld [vmem:[#allocation7 + $0x60] sm:$0xff]
        %v813 = vld [vmem:[#allocation7 + $0x68] sm:$0xff]
        %v814 = vld [vmem:[#allocation7 + $0x70] sm:$0xff]
        %v815 = vld [vmem:[#allocation7 + $0x78] sm:$0xff]
        %v816 = vld [vmem:[%s3] sm:$0x1]
        %v818 = vperm.slane %v816, 0
        %820 = vmatpush.msra.mxu0 %v815
        %821 = vmatpush.msra.mxu0 %v814
        %822 = vmatpush.msra.mxu0 %v813
        %823 = vmatpush.msra.mxu0 %v812
        %824 = vmatpush.msra.mxu0 %v811
        %825 = vmatpush.msra.mxu0 %v810
        %826 = vmatpush.msra.mxu0 %v809
        %827 = vmatpush.msra.mxu0 %v808
        %828 = vmatpush.msra.mxu0 %v807
        %829 = vmatpush.msra.mxu0 %v806
        %830 = vmatpush.msra.mxu0 %v805
        %831 = vmatpush.msra.mxu0 %v804
        %832 = vmatpush.msra.mxu0 %v803
        %833 = vmatpush.msra.mxu0 %v802
        %834 = vmatpush.msra.mxu0 %v801
        %835 = vmatpush.msra.mxu0 %v800
        %836 = vmatmul.f32.gmra.mxu0 %v796
        %v837 = vpop.f32.mrf.mxu0
        %v838 = vadd.f32 %v818, %v837
        %839 = vmatmul.f32.gmra.mxu0 %v797
        %v840 = vpop.f32.mrf.mxu0
        %v841 = vadd.f32 %v818, %v840
        %842 = vmatmul.f32.gmra.mxu0 %v798
        %v843 = vpop.f32.mrf.mxu0
        %v844 = vadd.f32 %v818, %v843
        %845 = vmatmul.f32.gmra.mxu0 %v799
        %v846 = vpop.f32.mrf.mxu0
        %v847 = vadd.f32 %v818, %v846
        %848 = vdwg.mxu0
        %v849 = vxor.u32 %v838, 2147483648
        %v850 = vxor.u32 %v841, 2147483648
        %v851 = vxor.u32 %v844, 2147483648
        %v852 = vxor.u32 %v847, 2147483648
        %v853 = vmul.f32 %v849, 1.442695
        %v854 = vpow.pop %v853
        %v855 = vmul.f32 %v850, 1.442695
        %v856 = vpow.pop %v855
        %v857 = vmul.f32 %v851, 1.442695
        %v858 = vpow.pop %v857
        %v859 = vmul.f32 %v852, 1.442695
        %v860 = vpow.pop %v859
        %v861 = vadd.f32 %v854, 1.0
        %v862 = vadd.f32 %v856, 1.0
        %v863 = vadd.f32 %v858, 1.0
        %v864 = vadd.f32 %v860, 1.0
        %v865 = vrcp.pop %v861
        %v866 = vmul.f32 %v861, %v865
        %v867 = vsub.f32 1.0, %v866
        %v868 = vmul.f32 %v865, %v867
        %v869 = vadd.f32 %v865, %v868
        %vm870 = vweird.f32 %v861
        %vm871 = vweird.f32 %v865
        %vm872 = vmor %vm870, %vm871
        %v873 = vsel %vm872, %v865, %v869
        %v874 = vand.u32 2147483647, %v861
        %vm875 = vcmp.eq.f32.partialorder %v874, 8.507059e+37
        %v876 = vand.u32 %v861, 2147483648
        %v877 = vor.u32 1.1754944e-38, %v876
        %v878 = vsel %vm875, %v877, %v873
        %v879 = vmul.f32 1.0, %v878
        %v880 = vrcp.pop %v862
        %v881 = vmul.f32 %v862, %v880
        %v882 = vsub.f32 1.0, %v881
        %v883 = vmul.f32 %v880, %v882
        %v884 = vadd.f32 %v880, %v883
        %vm885 = vweird.f32 %v862
        %vm886 = vweird.f32 %v880
        %vm887 = vmor %vm885, %vm886
        %v888 = vsel %vm887, %v880, %v884
        %v889 = vand.u32 2147483647, %v862
        %vm890 = vcmp.eq.f32.partialorder %v889, 8.507059e+37
        %v891 = vand.u32 %v862, 2147483648
        %v892 = vor.u32 1.1754944e-38, %v891
        %v893 = vsel %vm890, %v892, %v888
        %v894 = vmul.f32 1.0, %v893
        %v895 = vrcp.pop %v863
        %v896 = vmul.f32 %v863, %v895
        %v897 = vsub.f32 1.0, %v896
        %v898 = vmul.f32 %v895, %v897
        %v899 = vadd.f32 %v895, %v898
        %vm900 = vweird.f32 %v863
        %vm901 = vweird.f32 %v895
        %vm902 = vmor %vm900, %vm901
        %v903 = vsel %vm902, %v895, %v899
        %v904 = vand.u32 2147483647, %v863
        %vm905 = vcmp.eq.f32.partialorder %v904, 8.507059e+37
        %v906 = vand.u32 %v863, 2147483648
        %v907 = vor.u32 1.1754944e-38, %v906
        %v908 = vsel %vm905, %v907, %v903
        %v909 = vmul.f32 1.0, %v908
        %v910 = vrcp.pop %v864
        %v911 = vmul.f32 %v864, %v910
        %v912 = vsub.f32 1.0, %v911
        %v913 = vmul.f32 %v910, %v912
        %v914 = vadd.f32 %v910, %v913
        %vm915 = vweird.f32 %v864
        %vm916 = vweird.f32 %v910
        %vm917 = vmor %vm915, %vm916
        %v918 = vsel %vm917, %v910, %v914
        %v919 = vand.u32 2147483647, %v864
        %vm920 = vcmp.eq.f32.partialorder %v919, 8.507059e+37
        %v921 = vand.u32 %v864, 2147483648
        %v922 = vor.u32 1.1754944e-38, %v921
        %v923 = vsel %vm920, %v922, %v918
        %v924 = vmul.f32 1.0, %v923
        %v925 = vmul.f32 %v838, %v879
        %v926 = vmul.f32 %v841, %v894
        %v927 = vmul.f32 %v844, %v909
        %v928 = vmul.f32 %v847, %v924
        %s929 = scalar_select %p301, 1, 0
        %v930 = vstv %s929
        %vm931 = vcmp.eq.s32.totalorder %v930, 1
        %v932 = vsel %vm931, %v925, 0.0
        %v933 = vsel %vm931, %v926, 0.0
        %s934 = scalar_select %p329, 1, 0
        %v935 = vstv %s934
        %vm936 = vcmp.eq.s32.totalorder %v935, 1
        %v937 = vsel %vm936, %v927, 0.0
        %v938 = vsel %vm936, %v928, 0.0
        %v939 = vlaneseq
        %v940 = vshrl.u32 %v939, 7
        %v941 = vadd.s32 %v940, 8
        %s942 = scalar_lea.vmem [#allocation9], 384
        %v943 = vld [vmem:[%s942] sm:$0xff]
        %v944 = vld [vmem:[%s942 + $0x8] sm:$0xff]
        %v945 = vld [vmem:[%s942 + $0x10] sm:$0xff]
        %v946 = vld [vmem:[%s942 + $0x18] sm:$0xff]
        %v947 = vld [vmem:[%s942 + $0x20] sm:$0xff]
        %v948 = vld [vmem:[%s942 + $0x28] sm:$0xff]
        %v949 = vld [vmem:[%s942 + $0x30] sm:$0xff]
        %v950 = vld [vmem:[%s942 + $0x38] sm:$0xff]
        %v951 = vld [vmem:[%s942 + $0x40] sm:$0xff]
        %v952 = vld [vmem:[%s942 + $0x48] sm:$0xff]
        %v953 = vld [vmem:[%s942 + $0x50] sm:$0xff]
        %v954 = vld [vmem:[%s942 + $0x58] sm:$0xff]
        %v955 = vld [vmem:[%s942 + $0x60] sm:$0xff]
        %v956 = vld [vmem:[%s942 + $0x68] sm:$0xff]
        %v957 = vld [vmem:[%s942 + $0x70] sm:$0xff]
        %v958 = vld [vmem:[%s942 + $0x78] sm:$0xff]
        %v959 = vld [vmem:[%s942 + $0x80] sm:$0xff]
        %v960 = vld [vmem:[%s942 + $0x88] sm:$0xff]
        %v961 = vld [vmem:[%s942 + $0x90] sm:$0xff]
        %v962 = vld [vmem:[%s942 + $0x98] sm:$0xff]
        %v963 = vld [vmem:[%s942 + $0xa0] sm:$0xff]
        %v964 = vld [vmem:[%s942 + $0xa8] sm:$0xff]
        %v965 = vld [vmem:[%s942 + $0xb0] sm:$0xff]
        %v966 = vld [vmem:[%s942 + $0xb8] sm:$0xff]
        %v967 = vld [vmem:[%s942 + $0xc0] sm:$0xff]
        %v968 = vld [vmem:[%s942 + $0xc8] sm:$0xff]
        %v969 = vld [vmem:[%s942 + $0xd0] sm:$0xff]
        %v970 = vld [vmem:[%s942 + $0xd8] sm:$0xff]
        %v971 = vld [vmem:[%s942 + $0xe0] sm:$0xff]
        %v972 = vld [vmem:[%s942 + $0xe8] sm:$0xff]
        %v973 = vld [vmem:[%s942 + $0xf0] sm:$0xff]
        %v974 = vld [vmem:[%s942 + $0xf8] sm:$0xff]
        %v975 = vld [vmem:[%s942 + $0x100] sm:$0xff]
        %v976 = vld [vmem:[%s942 + $0x108] sm:$0xff]
        %v977 = vld [vmem:[%s942 + $0x110] sm:$0xff]
        %v978 = vld [vmem:[%s942 + $0x118] sm:$0xff]
        %v979 = vld [vmem:[%s942 + $0x120] sm:$0xff]
        %v980 = vld [vmem:[%s942 + $0x128] sm:$0xff]
        %v981 = vld [vmem:[%s942 + $0x130] sm:$0xff]
        %v982 = vld [vmem:[%s942 + $0x138] sm:$0xff]
        %v983 = vld [vmem:[%s942 + $0x140] sm:$0xff]
        %v984 = vld [vmem:[%s942 + $0x148] sm:$0xff]
        %v985 = vld [vmem:[%s942 + $0x150] sm:$0xff]
        %v986 = vld [vmem:[%s942 + $0x158] sm:$0xff]
        %v987 = vld [vmem:[%s942 + $0x160] sm:$0xff]
        %v988 = vld [vmem:[%s942 + $0x168] sm:$0xff]
        %v989 = vld [vmem:[%s942 + $0x170] sm:$0xff]
        %v990 = vld [vmem:[%s942 + $0x178] sm:$0xff]
        %vm991 = vcmp.eq.s32.totalorder %v940, 0
        %vm992 = vcmp.eq.s32.totalorder %v941, 0
        %v993 = vrot.slane %v932, 7
        %v994 = vrot.slane %v765, 7
        %v995 = vrot.slane %v767, 7
        %v996 = vrot.slane %v933, 7
        %v997 = vrot.slane %v766, 7
        %v998 = vrot.slane %v768, 7
        %v999 = vrot.slane %v769, 7
        %v1000 = vrot.slane %v770, 7
        %v1001 = vrot.slane %v771, 7
        %v1002 = vrot.slane %v772, 7
        %v1003 = vrot.slane %v773, 7
        %v1004 = vrot.slane %v774, 7
        %v1005 = vrot.slane %v775, 7
        %v1006 = vrot.slane %v776, 7
        %v1007 = vrot.slane %v777, 7
        %v1008 = vrot.slane %v778, 7
        %v1009 = vrot.slane %v779, 7
        %v1010 = vrot.slane %v780, 7
        %v1011 = vrot.slane %v937, 7
        %v1012 = vrot.slane %v938, 7
        %vm1013 = vcmp.lt.s32.totalorder %v940, 1
        %v1014 = vsel %vm1013, %v1007, %v1008
        %v1015 = vsel %vm1013, %v1009, %v1010
        %v1016 = vsel %vm1013, %v1011, %v1012
        %v1017 = vsel %vm1013, %v1006, %v1007
        %v1018 = vsel %vm1013, %v1008, %v1009
        %v1019 = vsel %vm1013, %v1010, %v1011
        %v1020 = vsel %vm1013, %v1005, %v1006
        %v1021 = vsel %vm1013, %v1004, %v1005
        %v1022 = vsel %vm1013, %v1003, %v1004
        %v1023 = vsel %vm1013, %v1002, %v1003
        %v1024 = vsel %vm1013, %v1001, %v1002
        %v1025 = vsel %vm1013, %v1000, %v1001
        %v1026 = vsel %vm1013, %v999, %v1000
        %v1027 = vsel %vm1013, %v998, %v999
        %v1028 = vsel %vm1013, %v995, %v998
        %v1029 = vsel %vm1013, %v997, %v995
        %v1030 = vsel %vm1013, %v994, %v997
        %v1031 = vsel %vm1013, %v996, %v994
        %v1032 = vsel %vm1013, %v993, %v996
        %v1033 = vsel %vm1013, %v1008, %v993
        %v1034 = vsel %vm1013, %v1010, %v994
        %v1035 = vsel %vm1013, %v1012, %v995
        %v1036 = vsel %vm991, 1, 0
        %v1037 = vsel %vm992, 1, 0
        %vm1038 = vcmp.eq.s32.totalorder %v1036, 1
        %vm1039 = vcmp.eq.s32.totalorder %v1037, 1
        %v1040 = vsel %vm1038, 0.0, %v1033
        %v1041 = vsel %vm1038, 0.0, %v1034
        %v1042 = vsel %vm1038, 0.0, %v1035
        %v1043 = vsel %vm1039, 0.0, %v1032
        %v1044 = vsel %vm1039, 0.0, %v1030
        %v1045 = vsel %vm1039, 0.0, %v1028
        %v1046 = vsel %vm1038, 0.0, %v1031
        %v1047 = vsel %vm1038, 0.0, %v1029
        %v1048 = vsel %vm1038, 0.0, %v1027
        %v1049 = vsel %vm1039, 0.0, %v1026
        %v1050 = vsel %vm1038, 0.0, %v1025
        %v1051 = vsel %vm1039, 0.0, %v1024
        %v1052 = vsel %vm1038, 0.0, %v1023
        %v1053 = vsel %vm1039, 0.0, %v1022
        %v1054 = vsel %vm1038, 0.0, %v1021
        %v1055 = vsel %vm1039, 0.0, %v1020
        %v1056 = vsel %vm1038, 0.0, %v1017
        %v1057 = vsel %vm1039, 0.0, %v1014
        %v1058 = vsel %vm1038, 0.0, %v1018
        %v1059 = vsel %vm1039, 0.0, %v1015
        %v1060 = vsel %vm1038, 0.0, %v1019
        %v1061 = vsel %vm1039, 0.0, %v1016
        %v1062 = vld [vmem:[#allocation9] sm:$0xff]
        %v1063 = vld [vmem:[#allocation9 + $0x8] sm:$0xff]
        %v1064 = vld [vmem:[#allocation9 + $0x10] sm:$0xff]
        %v1065 = vld [vmem:[#allocation9 + $0x18] sm:$0xff]
        %v1066 = vld [vmem:[#allocation9 + $0x20] sm:$0xff]
        %v1067 = vld [vmem:[#allocation9 + $0x28] sm:$0xff]
        %v1068 = vld [vmem:[#allocation9 + $0x30] sm:$0xff]
        %v1069 = vld [vmem:[#allocation9 + $0x38] sm:$0xff]
        %v1070 = vld [vmem:[#allocation9 + $0x40] sm:$0xff]
        %v1071 = vld [vmem:[#allocation9 + $0x48] sm:$0xff]
        %v1072 = vld [vmem:[#allocation9 + $0x50] sm:$0xff]
        %v1073 = vld [vmem:[#allocation9 + $0x58] sm:$0xff]
        %v1074 = vld [vmem:[#allocation9 + $0x60] sm:$0xff]
        %v1075 = vld [vmem:[#allocation9 + $0x68] sm:$0xff]
        %v1076 = vld [vmem:[#allocation9 + $0x70] sm:$0xff]
        %v1077 = vld [vmem:[#allocation9 + $0x78] sm:$0xff]
        %v1078 = vld [vmem:[#allocation9 + $0x80] sm:$0xff]
        %v1079 = vld [vmem:[#allocation9 + $0x88] sm:$0xff]
        %v1080 = vld [vmem:[#allocation9 + $0x90] sm:$0xff]
        %v1081 = vld [vmem:[#allocation9 + $0x98] sm:$0xff]
        %v1082 = vld [vmem:[#allocation9 + $0xa0] sm:$0xff]
        %v1083 = vld [vmem:[#allocation9 + $0xa8] sm:$0xff]
        %v1084 = vld [vmem:[#allocation9 + $0xb0] sm:$0xff]
        %v1085 = vld [vmem:[#allocation9 + $0xb8] sm:$0xff]
        %v1086 = vld [vmem:[#allocation9 + $0xc0] sm:$0xff]
        %v1087 = vld [vmem:[#allocation9 + $0xc8] sm:$0xff]
        %v1088 = vld [vmem:[#allocation9 + $0xd0] sm:$0xff]
        %v1089 = vld [vmem:[#allocation9 + $0xd8] sm:$0xff]
        %v1090 = vld [vmem:[#allocation9 + $0xe0] sm:$0xff]
        %v1091 = vld [vmem:[#allocation9 + $0xe8] sm:$0xff]
        %v1092 = vld [vmem:[#allocation9 + $0xf0] sm:$0xff]
        %v1093 = vld [vmem:[#allocation9 + $0xf8] sm:$0xff]
        %v1094 = vld [vmem:[#allocation9 + $0x100] sm:$0xff]
        %v1095 = vld [vmem:[#allocation9 + $0x108] sm:$0xff]
        %v1096 = vld [vmem:[#allocation9 + $0x110] sm:$0xff]
        %v1097 = vld [vmem:[#allocation9 + $0x118] sm:$0xff]
        %v1098 = vld [vmem:[#allocation9 + $0x120] sm:$0xff]
        %v1099 = vld [vmem:[#allocation9 + $0x128] sm:$0xff]
        %v1100 = vld [vmem:[#allocation9 + $0x130] sm:$0xff]
        %v1101 = vld [vmem:[#allocation9 + $0x138] sm:$0xff]
        %v1102 = vld [vmem:[#allocation9 + $0x140] sm:$0xff]
        %v1103 = vld [vmem:[#allocation9 + $0x148] sm:$0xff]
        %v1104 = vld [vmem:[#allocation9 + $0x150] sm:$0xff]
        %v1105 = vld [vmem:[#allocation9 + $0x158] sm:$0xff]
        %v1106 = vld [vmem:[#allocation9 + $0x160] sm:$0xff]
        %v1107 = vld [vmem:[#allocation9 + $0x168] sm:$0xff]
        %v1108 = vld [vmem:[#allocation9 + $0x170] sm:$0xff]
        %v1109 = vld [vmem:[#allocation9 + $0x178] sm:$0xff]
        %1110 = vmatpush.msra.mxu0 %v1077
        %1111 = vmatpush.msra.mxu0 %v1076
        %1112 = vmatpush.msra.mxu0 %v1075
        %1113 = vmatpush.msra.mxu0 %v1074
        %1114 = vmatpush.msra.mxu0 %v1073
        %1115 = vmatpush.msra.mxu0 %v1072
        %1116 = vmatpush.msra.mxu0 %v1071
        %1117 = vmatpush.msra.mxu0 %v1070
        %1118 = vmatpush.msra.mxu0 %v1069
        %1119 = vmatpush.msra.mxu0 %v1068
        %1120 = vmatpush.msra.mxu0 %v1067
        %1121 = vmatpush.msra.mxu0 %v1066
        %1122 = vmatpush.msra.mxu0 %v1065
        %1123 = vmatpush.msra.mxu0 %v1064
        %1124 = vmatpush.msra.mxu0 %v1063
        %1125 = vmatpush.msra.mxu0 %v1062
        %1126 = vmatmul.f32.gmra.mxu0 %v1040
        %v1127 = vpop.f32.mrf.mxu0
        %v1128 = vadd.f32 0.0, %v1127
        %1129 = vmatmul.f32.gmra.mxu0 %v1043
        %v1130 = vpop.f32.mrf.mxu0
        %v1131 = vadd.f32 0.0, %v1130
        %1132 = vmatmul.f32.gmra.mxu0 %v1046
        %v1133 = vpop.f32.mrf.mxu0
        %v1134 = vadd.f32 0.0, %v1133
        %1135 = vmatmul.f32.gmra.mxu0 %v1044
        %v1136 = vpop.f32.mrf.mxu0
        %v1137 = vadd.f32 0.0, %v1136
        %1138 = vmatmul.f32.gmra.mxu0 %v1047
        %v1139 = vpop.f32.mrf.mxu0
        %v1140 = vadd.f32 0.0, %v1139
        %1141 = vmatmul.f32.gmra.mxu0 %v1045
        %v1142 = vpop.f32.mrf.mxu0
        %v1143 = vadd.f32 0.0, %v1142
        %1144 = vmatmul.f32.gmra.mxu0 %v1048
        %v1145 = vpop.f32.mrf.mxu0
        %v1146 = vadd.f32 0.0, %v1145
        %1147 = vmatmul.f32.gmra.mxu0 %v1049
        %v1148 = vpop.f32.mrf.mxu0
        %v1149 = vadd.f32 0.0, %v1148
        %1150 = vmatmul.f32.gmra.mxu0 %v1050
        %v1151 = vpop.f32.mrf.mxu0
        %v1152 = vadd.f32 0.0, %v1151
        %1153 = vmatmul.f32.gmra.mxu0 %v1051
        %v1154 = vpop.f32.mrf.mxu0
        %v1155 = vadd.f32 0.0, %v1154
        %1156 = vmatmul.f32.gmra.mxu0 %v1052
        %v1157 = vpop.f32.mrf.mxu0
        %v1158 = vadd.f32 0.0, %v1157
        %1159 = vmatmul.f32.gmra.mxu0 %v1053
        %v1160 = vpop.f32.mrf.mxu0
        %v1161 = vadd.f32 0.0, %v1160
        %1162 = vmatmul.f32.gmra.mxu0 %v1054
        %v1163 = vpop.f32.mrf.mxu0
        %v1164 = vadd.f32 0.0, %v1163
        %1165 = vmatmul.f32.gmra.mxu0 %v1055
        %v1166 = vpop.f32.mrf.mxu0
        %v1167 = vadd.f32 0.0, %v1166
        %1168 = vmatmul.f32.gmra.mxu0 %v1056
        %v1169 = vpop.f32.mrf.mxu0
        %v1170 = vadd.f32 0.0, %v1169
        %1171 = vmatmul.f32.gmra.mxu0 %v1057
        %v1172 = vpop.f32.mrf.mxu0
        %v1173 = vadd.f32 0.0, %v1172
        %1174 = vdwg.mxu0
        %1175 = vmatpush.msra.mxu0 %v1093
        %1176 = vmatpush.msra.mxu0 %v1092
        %1177 = vmatpush.msra.mxu0 %v1091
        %1178 = vmatpush.msra.mxu0 %v1090
        %1179 = vmatpush.msra.mxu0 %v1089
        %1180 = vmatpush.msra.mxu0 %v1088
        %1181 = vmatpush.msra.mxu0 %v1087
        %1182 = vmatpush.msra.mxu0 %v1086
        %1183 = vmatpush.msra.mxu0 %v1085
        %1184 = vmatpush.msra.mxu0 %v1084
        %1185 = vmatpush.msra.mxu0 %v1083
        %1186 = vmatpush.msra.mxu0 %v1082
        %1187 = vmatpush.msra.mxu0 %v1081
        %1188 = vmatpush.msra.mxu0 %v1080
        %1189 = vmatpush.msra.mxu0 %v1079
        %1190 = vmatpush.msra.mxu0 %v1078
        %1191 = vmatmul.f32.gmra.mxu0 %v1041
        %v1192 = vpop.f32.mrf.mxu0
        %v1193 = vadd.f32 %v1128, %v1192
        %1194 = vmatmul.f32.gmra.mxu0 %v1044
        %v1195 = vpop.f32.mrf.mxu0
        %v1196 = vadd.f32 %v1131, %v1195
        %1197 = vmatmul.f32.gmra.mxu0 %v1047
        %v1198 = vpop.f32.mrf.mxu0
        %v1199 = vadd.f32 %v1134, %v1198
        %1200 = vmatmul.f32.gmra.mxu0 %v1045
        %v1201 = vpop.f32.mrf.mxu0
        %v1202 = vadd.f32 %v1137, %v1201
        %1203 = vmatmul.f32.gmra.mxu0 %v1048
        %v1204 = vpop.f32.mrf.mxu0
        %v1205 = vadd.f32 %v1140, %v1204
        %1206 = vmatmul.f32.gmra.mxu0 %v1049
        %v1207 = vpop.f32.mrf.mxu0
        %v1208 = vadd.f32 %v1143, %v1207
        %1209 = vmatmul.f32.gmra.mxu0 %v1050
        %v1210 = vpop.f32.mrf.mxu0
        %v1211 = vadd.f32 %v1146, %v1210
        %1212 = vmatmul.f32.gmra.mxu0 %v1051
        %v1213 = vpop.f32.mrf.mxu0
        %v1214 = vadd.f32 %v1149, %v1213
        %1215 = vmatmul.f32.gmra.mxu0 %v1052
        %v1216 = vpop.f32.mrf.mxu0
        %v1217 = vadd.f32 %v1152, %v1216
        %1218 = vmatmul.f32.gmra.mxu0 %v1053
        %v1219 = vpop.f32.mrf.mxu0
        %v1220 = vadd.f32 %v1155, %v1219
        %1221 = vmatmul.f32.gmra.mxu0 %v1054
        %v1222 = vpop.f32.mrf.mxu0
        %v1223 = vadd.f32 %v1158, %v1222
        %1224 = vmatmul.f32.gmra.mxu0 %v1055
        %v1225 = vpop.f32.mrf.mxu0
        %v1226 = vadd.f32 %v1161, %v1225
        %1227 = vmatmul.f32.gmra.mxu0 %v1056
        %v1228 = vpop.f32.mrf.mxu0
        %v1229 = vadd.f32 %v1164, %v1228
        %1230 = vmatmul.f32.gmra.mxu0 %v1057
        %v1231 = vpop.f32.mrf.mxu0
        %v1232 = vadd.f32 %v1167, %v1231
        %1233 = vmatmul.f32.gmra.mxu0 %v1058
        %v1234 = vpop.f32.mrf.mxu0
        %v1235 = vadd.f32 %v1170, %v1234
        %1236 = vmatmul.f32.gmra.mxu0 %v1059
        %v1237 = vpop.f32.mrf.mxu0
        %v1238 = vadd.f32 %v1173, %v1237
        %1239 = vdwg.mxu0
        %1240 = vmatpush.msra.mxu0 %v1109
        %1241 = vmatpush.msra.mxu0 %v1108
        %1242 = vmatpush.msra.mxu0 %v1107
        %1243 = vmatpush.msra.mxu0 %v1106
        %1244 = vmatpush.msra.mxu0 %v1105
        %1245 = vmatpush.msra.mxu0 %v1104
        %1246 = vmatpush.msra.mxu0 %v1103
        %1247 = vmatpush.msra.mxu0 %v1102
        %1248 = vmatpush.msra.mxu0 %v1101
        %1249 = vmatpush.msra.mxu0 %v1100
        %1250 = vmatpush.msra.mxu0 %v1099
        %1251 = vmatpush.msra.mxu0 %v1098
        %1252 = vmatpush.msra.mxu0 %v1097
        %1253 = vmatpush.msra.mxu0 %v1096
        %1254 = vmatpush.msra.mxu0 %v1095
        %1255 = vmatpush.msra.mxu0 %v1094
        %1256 = vmatmul.f32.gmra.mxu0 %v1042
        %v1257 = vpop.f32.mrf.mxu0
        %v1258 = vadd.f32 %v1193, %v1257
        %1259 = vmatmul.f32.gmra.mxu0 %v1045
        %v1260 = vpop.f32.mrf.mxu0
        %v1261 = vadd.f32 %v1196, %v1260
        %1262 = vmatmul.f32.gmra.mxu0 %v1048
        %v1263 = vpop.f32.mrf.mxu0
        %v1264 = vadd.f32 %v1199, %v1263
        %1265 = vmatmul.f32.gmra.mxu0 %v1049
        %v1266 = vpop.f32.mrf.mxu0
        %v1267 = vadd.f32 %v1202, %v1266
        %1268 = vmatmul.f32.gmra.mxu0 %v1050
        %v1269 = vpop.f32.mrf.mxu0
        %v1270 = vadd.f32 %v1205, %v1269
        %1271 = vmatmul.f32.gmra.mxu0 %v1051
        %v1272 = vpop.f32.mrf.mxu0
        %v1273 = vadd.f32 %v1208, %v1272
        %1274 = vmatmul.f32.gmra.mxu0 %v1052
        %v1275 = vpop.f32.mrf.mxu0
        %v1276 = vadd.f32 %v1211, %v1275
        %1277 = vmatmul.f32.gmra.mxu0 %v1053
        %v1278 = vpop.f32.mrf.mxu0
        %v1279 = vadd.f32 %v1214, %v1278
        %1280 = vmatmul.f32.gmra.mxu0 %v1054
        %v1281 = vpop.f32.mrf.mxu0
        %v1282 = vadd.f32 %v1217, %v1281
        %1283 = vmatmul.f32.gmra.mxu0 %v1055
        %v1284 = vpop.f32.mrf.mxu0
        %v1285 = vadd.f32 %v1220, %v1284
        %1286 = vmatmul.f32.gmra.mxu0 %v1056
        %v1287 = vpop.f32.mrf.mxu0
        %v1288 = vadd.f32 %v1223, %v1287
        %1289 = vmatmul.f32.gmra.mxu0 %v1057
        %v1290 = vpop.f32.mrf.mxu0
        %v1291 = vadd.f32 %v1226, %v1290
        %1292 = vmatmul.f32.gmra.mxu0 %v1058
        %v1293 = vpop.f32.mrf.mxu0
        %v1294 = vadd.f32 %v1229, %v1293
        %1295 = vmatmul.f32.gmra.mxu0 %v1059
        %v1296 = vpop.f32.mrf.mxu0
        %v1297 = vadd.f32 %v1232, %v1296
        %1298 = vmatmul.f32.gmra.mxu0 %v1060
        %v1299 = vpop.f32.mrf.mxu0
        %v1300 = vadd.f32 %v1235, %v1299
        %1301 = vmatmul.f32.gmra.mxu0 %v1061
        %v1302 = vpop.f32.mrf.mxu0
        %v1303 = vadd.f32 %v1238, %v1302
        %1304 = vdwg.mxu0
        %1305 = vmatpush.msra.mxu0 %v958
        %1306 = vmatpush.msra.mxu0 %v957
        %1307 = vmatpush.msra.mxu0 %v956
        %1308 = vmatpush.msra.mxu0 %v955
        %1309 = vmatpush.msra.mxu0 %v954
        %1310 = vmatpush.msra.mxu0 %v953
        %1311 = vmatpush.msra.mxu0 %v952
        %1312 = vmatpush.msra.mxu0 %v951
        %1313 = vmatpush.msra.mxu0 %v950
        %1314 = vmatpush.msra.mxu0 %v949
        %1315 = vmatpush.msra.mxu0 %v948
        %1316 = vmatpush.msra.mxu0 %v947
        %1317 = vmatpush.msra.mxu0 %v946
        %1318 = vmatpush.msra.mxu0 %v945
        %1319 = vmatpush.msra.mxu0 %v944
        %1320 = vmatpush.msra.mxu0 %v943
        %1321 = vmatmul.f32.gmra.mxu0 %v932
        %v1322 = vpop.f32.mrf.mxu0
        %v1323 = vadd.f32 %v1258, %v1322
        %1324 = vmatmul.f32.gmra.mxu0 %v933
        %v1325 = vpop.f32.mrf.mxu0
        %v1326 = vadd.f32 %v1261, %v1325
        %1327 = vmatmul.f32.gmra.mxu0 %v765
        %v1328 = vpop.f32.mrf.mxu0
        %v1329 = vadd.f32 %v1264, %v1328
        %1330 = vmatmul.f32.gmra.mxu0 %v766
        %v1331 = vpop.f32.mrf.mxu0
        %v1332 = vadd.f32 %v1267, %v1331
        %1333 = vmatmul.f32.gmra.mxu0 %v767
        %v1334 = vpop.f32.mrf.mxu0
        %v1335 = vadd.f32 %v1270, %v1334
        %1336 = vmatmul.f32.gmra.mxu0 %v768
        %v1337 = vpop.f32.mrf.mxu0
        %v1338 = vadd.f32 %v1273, %v1337
        %1339 = vmatmul.f32.gmra.mxu0 %v769
        %v1340 = vpop.f32.mrf.mxu0
        %v1341 = vadd.f32 %v1276, %v1340
        %1342 = vmatmul.f32.gmra.mxu0 %v770
        %v1343 = vpop.f32.mrf.mxu0
        %v1344 = vadd.f32 %v1279, %v1343
        %1345 = vmatmul.f32.gmra.mxu0 %v771
        %v1346 = vpop.f32.mrf.mxu0
        %v1347 = vadd.f32 %v1282, %v1346
        %1348 = vmatmul.f32.gmra.mxu0 %v772
        %v1349 = vpop.f32.mrf.mxu0
        %v1350 = vadd.f32 %v1285, %v1349
        %1351 = vmatmul.f32.gmra.mxu0 %v773
        %v1352 = vpop.f32.mrf.mxu0
        %v1353 = vadd.f32 %v1288, %v1352
        %1354 = vmatmul.f32.gmra.mxu0 %v774
        %v1355 = vpop.f32.mrf.mxu0
        %v1356 = vadd.f32 %v1291, %v1355
        %1357 = vmatmul.f32.gmra.mxu0 %v775
        %v1358 = vpop.f32.mrf.mxu0
        %v1359 = vadd.f32 %v1294, %v1358
        %1360 = vmatmul.f32.gmra.mxu0 %v776
        %v1361 = vpop.f32.mrf.mxu0
        %v1362 = vadd.f32 %v1297, %v1361
        %1363 = vmatmul.f32.gmra.mxu0 %v777
        %v1364 = vpop.f32.mrf.mxu0
        %v1365 = vadd.f32 %v1300, %v1364
        %1366 = vmatmul.f32.gmra.mxu0 %v778
        %v1367 = vpop.f32.mrf.mxu0
        %v1368 = vadd.f32 %v1303, %v1367
        %1369 = vdwg.mxu0
        %1370 = vmatpush.msra.mxu0 %v974
        %1371 = vmatpush.msra.mxu0 %v973
        %1372 = vmatpush.msra.mxu0 %v972
        %1373 = vmatpush.msra.mxu0 %v971
        %1374 = vmatpush.msra.mxu0 %v970
        %1375 = vmatpush.msra.mxu0 %v969
        %1376 = vmatpush.msra.mxu0 %v968
        %1377 = vmatpush.msra.mxu0 %v967
        %1378 = vmatpush.msra.mxu0 %v966
        %1379 = vmatpush.msra.mxu0 %v965
        %1380 = vmatpush.msra.mxu0 %v964
        %1381 = vmatpush.msra.mxu0 %v963
        %1382 = vmatpush.msra.mxu0 %v962
        %1383 = vmatpush.msra.mxu0 %v961
        %1384 = vmatpush.msra.mxu0 %v960
        %1385 = vmatpush.msra.mxu0 %v959
        %1386 = vmatmul.f32.gmra.mxu0 %v765
        %v1387 = vpop.f32.mrf.mxu0
        %v1388 = vadd.f32 %v1323, %v1387
        %1389 = vmatmul.f32.gmra.mxu0 %v766
        %v1390 = vpop.f32.mrf.mxu0
        %v1391 = vadd.f32 %v1326, %v1390
        %1392 = vmatmul.f32.gmra.mxu0 %v767
        %v1393 = vpop.f32.mrf.mxu0
        %v1394 = vadd.f32 %v1329, %v1393
        %1395 = vmatmul.f32.gmra.mxu0 %v768
        %v1396 = vpop.f32.mrf.mxu0
        %v1397 = vadd.f32 %v1332, %v1396
        %1398 = vmatmul.f32.gmra.mxu0 %v769
        %v1399 = vpop.f32.mrf.mxu0
        %v1400 = vadd.f32 %v1335, %v1399
        %1401 = vmatmul.f32.gmra.mxu0 %v770
        %v1402 = vpop.f32.mrf.mxu0
        %v1403 = vadd.f32 %v1338, %v1402
        %1404 = vmatmul.f32.gmra.mxu0 %v771
        %v1405 = vpop.f32.mrf.mxu0
        %v1406 = vadd.f32 %v1341, %v1405
        %1407 = vmatmul.f32.gmra.mxu0 %v772
        %v1408 = vpop.f32.mrf.mxu0
        %v1409 = vadd.f32 %v1344, %v1408
        %1410 = vmatmul.f32.gmra.mxu0 %v773
        %v1411 = vpop.f32.mrf.mxu0
        %v1412 = vadd.f32 %v1347, %v1411
        %1413 = vmatmul.f32.gmra.mxu0 %v774
        %v1414 = vpop.f32.mrf.mxu0
        %v1415 = vadd.f32 %v1350, %v1414
        %1416 = vmatmul.f32.gmra.mxu0 %v775
        %v1417 = vpop.f32.mrf.mxu0
        %v1418 = vadd.f32 %v1353, %v1417
        %1419 = vmatmul.f32.gmra.mxu0 %v776
        %v1420 = vpop.f32.mrf.mxu0
        %v1421 = vadd.f32 %v1356, %v1420
        %1422 = vmatmul.f32.gmra.mxu0 %v777
        %v1423 = vpop.f32.mrf.mxu0
        %v1424 = vadd.f32 %v1359, %v1423
        %1425 = vmatmul.f32.gmra.mxu0 %v778
        %v1426 = vpop.f32.mrf.mxu0
        %v1427 = vadd.f32 %v1362, %v1426
        %1428 = vmatmul.f32.gmra.mxu0 %v779
        %v1429 = vpop.f32.mrf.mxu0
        %v1430 = vadd.f32 %v1365, %v1429
        %1431 = vmatmul.f32.gmra.mxu0 %v780
        %v1432 = vpop.f32.mrf.mxu0
        %v1433 = vadd.f32 %v1368, %v1432
        %1434 = vdwg.mxu0
        %1435 = vmatpush.msra.mxu0 %v990
        %1436 = vmatpush.msra.mxu0 %v989
        %1437 = vmatpush.msra.mxu0 %v988
        %1438 = vmatpush.msra.mxu0 %v987
        %1439 = vmatpush.msra.mxu0 %v986
        %1440 = vmatpush.msra.mxu0 %v985
        %1441 = vmatpush.msra.mxu0 %v984
        %1442 = vmatpush.msra.mxu0 %v983
        %1443 = vmatpush.msra.mxu0 %v982
        %1444 = vmatpush.msra.mxu0 %v981
        %1445 = vmatpush.msra.mxu0 %v980
        %1446 = vmatpush.msra.mxu0 %v979
        %1447 = vmatpush.msra.mxu0 %v978
        %1448 = vmatpush.msra.mxu0 %v977
        %1449 = vmatpush.msra.mxu0 %v976
        %1450 = vmatpush.msra.mxu0 %v975
        %1451 = vmatmul.f32.gmra.mxu0 %v767
        %v1452 = vpop.f32.mrf.mxu0
        %v1453 = vadd.f32 %v1388, %v1452
        %1454 = vmatmul.f32.gmra.mxu0 %v768
        %v1455 = vpop.f32.mrf.mxu0
        %v1456 = vadd.f32 %v1391, %v1455
        %1457 = vmatmul.f32.gmra.mxu0 %v769
        %v1458 = vpop.f32.mrf.mxu0
        %v1459 = vadd.f32 %v1394, %v1458
        %1460 = vmatmul.f32.gmra.mxu0 %v770
        %v1461 = vpop.f32.mrf.mxu0
        %v1462 = vadd.f32 %v1397, %v1461
        %1463 = vmatmul.f32.gmra.mxu0 %v771
        %v1464 = vpop.f32.mrf.mxu0
        %v1465 = vadd.f32 %v1400, %v1464
        %1466 = vmatmul.f32.gmra.mxu0 %v772
        %v1467 = vpop.f32.mrf.mxu0
        %v1468 = vadd.f32 %v1403, %v1467
        %1469 = vmatmul.f32.gmra.mxu0 %v773
        %v1470 = vpop.f32.mrf.mxu0
        %v1471 = vadd.f32 %v1406, %v1470
        %1472 = vmatmul.f32.gmra.mxu0 %v774
        %v1473 = vpop.f32.mrf.mxu0
        %v1474 = vadd.f32 %v1409, %v1473
        %1475 = vmatmul.f32.gmra.mxu0 %v775
        %v1476 = vpop.f32.mrf.mxu0
        %v1477 = vadd.f32 %v1412, %v1476
        %1478 = vmatmul.f32.gmra.mxu0 %v776
        %v1479 = vpop.f32.mrf.mxu0
        %v1480 = vadd.f32 %v1415, %v1479
        %1481 = vmatmul.f32.gmra.mxu0 %v777
        %v1482 = vpop.f32.mrf.mxu0
        %v1483 = vadd.f32 %v1418, %v1482
        %1484 = vmatmul.f32.gmra.mxu0 %v778
        %v1485 = vpop.f32.mrf.mxu0
        %v1486 = vadd.f32 %v1421, %v1485
        %1487 = vmatmul.f32.gmra.mxu0 %v779
        %v1488 = vpop.f32.mrf.mxu0
        %v1489 = vadd.f32 %v1424, %v1488
        %1490 = vmatmul.f32.gmra.mxu0 %v780
        %v1491 = vpop.f32.mrf.mxu0
        %v1492 = vadd.f32 %v1427, %v1491
        %1493 = vmatmul.f32.gmra.mxu0 %v937
        %v1494 = vpop.f32.mrf.mxu0
        %v1495 = vadd.f32 %v1430, %v1494
        %1496 = vmatmul.f32.gmra.mxu0 %v938
        %v1497 = vpop.f32.mrf.mxu0
        %v1498 = vadd.f32 %v1433, %v1497
        %1499 = vdwg.mxu0
        %vm1500 = vcmp.eq.s32.totalorder %v940, 15
        %vm1501 = vcmp.eq.s32.totalorder %v941, 15
        %v1502 = vrot.slane %v932, 1
        %v1503 = vrot.slane %v765, 1
        %v1504 = vrot.slane %v767, 1
        %v1505 = vrot.slane %v933, 1
        %v1506 = vrot.slane %v766, 1
        %v1507 = vrot.slane %v768, 1
        %v1508 = vrot.slane %v769, 1
        %v1509 = vrot.slane %v770, 1
        %v1510 = vrot.slane %v771, 1
        %v1511 = vrot.slane %v772, 1
        %v1512 = vrot.slane %v773, 1
        %v1513 = vrot.slane %v774, 1
        %v1514 = vrot.slane %v775, 1
        %v1515 = vrot.slane %v776, 1
        %v1516 = vrot.slane %v777, 1
        %v1517 = vrot.slane %v778, 1
        %v1518 = vrot.slane %v779, 1
        %v1519 = vrot.slane %v780, 1
        %v1520 = vrot.slane %v937, 1
        %v1521 = vrot.slane %v938, 1
        %vm1522 = vcmp.lt.s32.totalorder %v940, 7
        %v1523 = vsel %vm1522, %v1516, %v1517
        %v1524 = vsel %vm1522, %v1518, %v1519
        %v1525 = vsel %vm1522, %v1520, %v1521
        %v1526 = vsel %vm1522, %v1515, %v1516
        %v1527 = vsel %vm1522, %v1517, %v1518
        %v1528 = vsel %vm1522, %v1519, %v1520
        %v1529 = vsel %vm1522, %v1514, %v1515
        %v1530 = vsel %vm1522, %v1513, %v1514
        %v1531 = vsel %vm1522, %v1512, %v1513
        %v1532 = vsel %vm1522, %v1511, %v1512
        %v1533 = vsel %vm1522, %v1510, %v1511
        %v1534 = vsel %vm1522, %v1509, %v1510
        %v1535 = vsel %vm1522, %v1508, %v1509
        %v1536 = vsel %vm1522, %v1507, %v1508
        %v1537 = vsel %vm1522, %v1504, %v1507
        %v1538 = vsel %vm1522, %v1506, %v1504
        %v1539 = vsel %vm1522, %v1503, %v1506
        %v1540 = vsel %vm1522, %v1505, %v1503
        %v1541 = vsel %vm1522, %v1502, %v1505
        %v1542 = vsel %vm1522, %v1517, %v1502
        %v1543 = vsel %vm1522, %v1519, %v1503
        %v1544 = vsel %vm1522, %v1521, %v1504
        %v1545 = vsel %vm1500, 1, 0
        %v1546 = vsel %vm1501, 1, 0
        %vm1547 = vcmp.eq.s32.totalorder %v1545, 1
        %vm1548 = vcmp.eq.s32.totalorder %v1546, 1
        %v1549 = vsel %vm1547, 0.0, %v1541
        %v1550 = vsel %vm1547, 0.0, %v1539
        %v1551 = vsel %vm1547, 0.0, %v1537
        %v1552 = vsel %vm1548, 0.0, %v1540
        %v1553 = vsel %vm1548, 0.0, %v1538
        %v1554 = vsel %vm1548, 0.0, %v1536
        %v1555 = vsel %vm1547, 0.0, %v1535
        %v1556 = vsel %vm1548, 0.0, %v1534
        %v1557 = vsel %vm1547, 0.0, %v1533
        %v1558 = vsel %vm1548, 0.0, %v1532
        %v1559 = vsel %vm1547, 0.0, %v1531
        %v1560 = vsel %vm1548, 0.0, %v1530
        %v1561 = vsel %vm1547, 0.0, %v1529
        %v1562 = vsel %vm1548, 0.0, %v1526
        %v1563 = vsel %vm1547, 0.0, %v1523
        %v1564 = vsel %vm1548, 0.0, %v1527
        %v1565 = vsel %vm1547, 0.0, %v1524
        %v1566 = vsel %vm1548, 0.0, %v1528
        %v1567 = vsel %vm1547, 0.0, %v1525
        %v1568 = vsel %vm1548, 0.0, %v1542
        %v1569 = vsel %vm1548, 0.0, %v1543
        %v1570 = vsel %vm1548, 0.0, %v1544
        %s1571 = scalar_lea.vmem [#allocation9], 768
        %v1572 = vld [vmem:[%s1571] sm:$0xff]
        %v1573 = vld [vmem:[%s1571 + $0x8] sm:$0xff]
        %v1574 = vld [vmem:[%s1571 + $0x10] sm:$0xff]
        %v1575 = vld [vmem:[%s1571 + $0x18] sm:$0xff]
        %v1576 = vld [vmem:[%s1571 + $0x20] sm:$0xff]
        %v1577 = vld [vmem:[%s1571 + $0x28] sm:$0xff]
        %v1578 = vld [vmem:[%s1571 + $0x30] sm:$0xff]
        %v1579 = vld [vmem:[%s1571 + $0x38] sm:$0xff]
        %v1580 = vld [vmem:[%s1571 + $0x40] sm:$0xff]
        %v1581 = vld [vmem:[%s1571 + $0x48] sm:$0xff]
        %v1582 = vld [vmem:[%s1571 + $0x50] sm:$0xff]
        %v1583 = vld [vmem:[%s1571 + $0x58] sm:$0xff]
        %v1584 = vld [vmem:[%s1571 + $0x60] sm:$0xff]
        %v1585 = vld [vmem:[%s1571 + $0x68] sm:$0xff]
        %v1586 = vld [vmem:[%s1571 + $0x70] sm:$0xff]
        %v1587 = vld [vmem:[%s1571 + $0x78] sm:$0xff]
        %v1588 = vld [vmem:[%s1571 + $0x80] sm:$0xff]
        %v1589 = vld [vmem:[%s1571 + $0x88] sm:$0xff]
        %v1590 = vld [vmem:[%s1571 + $0x90] sm:$0xff]
        %v1591 = vld [vmem:[%s1571 + $0x98] sm:$0xff]
        %v1592 = vld [vmem:[%s1571 + $0xa0] sm:$0xff]
        %v1593 = vld [vmem:[%s1571 + $0xa8] sm:$0xff]
        %v1594 = vld [vmem:[%s1571 + $0xb0] sm:$0xff]
        %v1595 = vld [vmem:[%s1571 + $0xb8] sm:$0xff]
        %v1596 = vld [vmem:[%s1571 + $0xc0] sm:$0xff]
        %v1597 = vld [vmem:[%s1571 + $0xc8] sm:$0xff]
        %v1598 = vld [vmem:[%s1571 + $0xd0] sm:$0xff]
        %v1599 = vld [vmem:[%s1571 + $0xd8] sm:$0xff]
        %v1600 = vld [vmem:[%s1571 + $0xe0] sm:$0xff]
        %v1601 = vld [vmem:[%s1571 + $0xe8] sm:$0xff]
        %v1602 = vld [vmem:[%s1571 + $0xf0] sm:$0xff]
        %v1603 = vld [vmem:[%s1571 + $0xf8] sm:$0xff]
        %v1604 = vld [vmem:[%s1571 + $0x100] sm:$0xff]
        %v1605 = vld [vmem:[%s1571 + $0x108] sm:$0xff]
        %v1606 = vld [vmem:[%s1571 + $0x110] sm:$0xff]
        %v1607 = vld [vmem:[%s1571 + $0x118] sm:$0xff]
        %v1608 = vld [vmem:[%s1571 + $0x120] sm:$0xff]
        %v1609 = vld [vmem:[%s1571 + $0x128] sm:$0xff]
        %v1610 = vld [vmem:[%s1571 + $0x130] sm:$0xff]
        %v1611 = vld [vmem:[%s1571 + $0x138] sm:$0xff]
        %v1612 = vld [vmem:[%s1571 + $0x140] sm:$0xff]
        %v1613 = vld [vmem:[%s1571 + $0x148] sm:$0xff]
        %v1614 = vld [vmem:[%s1571 + $0x150] sm:$0xff]
        %v1615 = vld [vmem:[%s1571 + $0x158] sm:$0xff]
        %v1616 = vld [vmem:[%s1571 + $0x160] sm:$0xff]
        %v1617 = vld [vmem:[%s1571 + $0x168] sm:$0xff]
        %v1618 = vld [vmem:[%s1571 + $0x170] sm:$0xff]
        %v1619 = vld [vmem:[%s1571 + $0x178] sm:$0xff]
        %1620 = vmatpush.msra.mxu0 %v1587
        %1621 = vmatpush.msra.mxu0 %v1586
        %1622 = vmatpush.msra.mxu0 %v1585
        %1623 = vmatpush.msra.mxu0 %v1584
        %1624 = vmatpush.msra.mxu0 %v1583
        %1625 = vmatpush.msra.mxu0 %v1582
        %1626 = vmatpush.msra.mxu0 %v1581
        %1627 = vmatpush.msra.mxu0 %v1580
        %1628 = vmatpush.msra.mxu0 %v1579
        %1629 = vmatpush.msra.mxu0 %v1578
        %1630 = vmatpush.msra.mxu0 %v1577
        %1631 = vmatpush.msra.mxu0 %v1576
        %1632 = vmatpush.msra.mxu0 %v1575
        %1633 = vmatpush.msra.mxu0 %v1574
        %1634 = vmatpush.msra.mxu0 %v1573
        %1635 = vmatpush.msra.mxu0 %v1572
        %1636 = vmatmul.f32.gmra.mxu0 %v1549
        %v1637 = vpop.f32.mrf.mxu0
        %v1638 = vadd.f32 0.0, %v1637
        %1639 = vmatmul.f32.gmra.mxu0 %v1552
        %v1640 = vpop.f32.mrf.mxu0
        %v1641 = vadd.f32 0.0, %v1640
        %1642 = vmatmul.f32.gmra.mxu0 %v1550
        %v1643 = vpop.f32.mrf.mxu0
        %v1644 = vadd.f32 0.0, %v1643
        %1645 = vmatmul.f32.gmra.mxu0 %v1553
        %v1646 = vpop.f32.mrf.mxu0
        %v1647 = vadd.f32 0.0, %v1646
        %1648 = vmatmul.f32.gmra.mxu0 %v1551
        %v1649 = vpop.f32.mrf.mxu0
        %v1650 = vadd.f32 0.0, %v1649
        %1651 = vmatmul.f32.gmra.mxu0 %v1554
        %v1652 = vpop.f32.mrf.mxu0
        %v1653 = vadd.f32 0.0, %v1652
        %1654 = vmatmul.f32.gmra.mxu0 %v1555
        %v1655 = vpop.f32.mrf.mxu0
        %v1656 = vadd.f32 0.0, %v1655
        %1657 = vmatmul.f32.gmra.mxu0 %v1556
        %v1658 = vpop.f32.mrf.mxu0
        %v1659 = vadd.f32 0.0, %v1658
        %1660 = vmatmul.f32.gmra.mxu0 %v1557
        %v1661 = vpop.f32.mrf.mxu0
        %v1662 = vadd.f32 0.0, %v1661
        %1663 = vmatmul.f32.gmra.mxu0 %v1558
        %v1664 = vpop.f32.mrf.mxu0
        %v1665 = vadd.f32 0.0, %v1664
        %1666 = vmatmul.f32.gmra.mxu0 %v1559
        %v1667 = vpop.f32.mrf.mxu0
        %v1668 = vadd.f32 0.0, %v1667
        %1669 = vmatmul.f32.gmra.mxu0 %v1560
        %v1670 = vpop.f32.mrf.mxu0
        %v1671 = vadd.f32 0.0, %v1670
        %1672 = vmatmul.f32.gmra.mxu0 %v1561
        %v1673 = vpop.f32.mrf.mxu0
        %v1674 = vadd.f32 0.0, %v1673
        %1675 = vmatmul.f32.gmra.mxu0 %v1562
        %v1676 = vpop.f32.mrf.mxu0
        %v1677 = vadd.f32 0.0, %v1676
        %1678 = vmatmul.f32.gmra.mxu0 %v1563
        %v1679 = vpop.f32.mrf.mxu0
        %v1680 = vadd.f32 0.0, %v1679
        %1681 = vmatmul.f32.gmra.mxu0 %v1568
        %v1682 = vpop.f32.mrf.mxu0
        %v1683 = vadd.f32 0.0, %v1682
        %1684 = vdwg.mxu0
        %1685 = vmatpush.msra.mxu0 %v1603
        %1686 = vmatpush.msra.mxu0 %v1602
        %1687 = vmatpush.msra.mxu0 %v1601
        %1688 = vmatpush.msra.mxu0 %v1600
        %1689 = vmatpush.msra.mxu0 %v1599
        %1690 = vmatpush.msra.mxu0 %v1598
        %1691 = vmatpush.msra.mxu0 %v1597
        %1692 = vmatpush.msra.mxu0 %v1596
        %1693 = vmatpush.msra.mxu0 %v1595
        %1694 = vmatpush.msra.mxu0 %v1594
        %1695 = vmatpush.msra.mxu0 %v1593
        %1696 = vmatpush.msra.mxu0 %v1592
        %1697 = vmatpush.msra.mxu0 %v1591
        %1698 = vmatpush.msra.mxu0 %v1590
        %1699 = vmatpush.msra.mxu0 %v1589
        %1700 = vmatpush.msra.mxu0 %v1588
        %1701 = vmatmul.f32.gmra.mxu0 %v1550
        %v1702 = vpop.f32.mrf.mxu0
        %v1703 = vadd.f32 %v1638, %v1702
        %1704 = vmatmul.f32.gmra.mxu0 %v1553
        %v1705 = vpop.f32.mrf.mxu0
        %v1706 = vadd.f32 %v1641, %v1705
        %1707 = vmatmul.f32.gmra.mxu0 %v1551
        %v1708 = vpop.f32.mrf.mxu0
        %v1709 = vadd.f32 %v1644, %v1708
        %1710 = vmatmul.f32.gmra.mxu0 %v1554
        %v1711 = vpop.f32.mrf.mxu0
        %v1712 = vadd.f32 %v1647, %v1711
        %1713 = vmatmul.f32.gmra.mxu0 %v1555
        %v1714 = vpop.f32.mrf.mxu0
        %v1715 = vadd.f32 %v1650, %v1714
        %1716 = vmatmul.f32.gmra.mxu0 %v1556
        %v1717 = vpop.f32.mrf.mxu0
        %v1718 = vadd.f32 %v1653, %v1717
        %1719 = vmatmul.f32.gmra.mxu0 %v1557
        %v1720 = vpop.f32.mrf.mxu0
        %v1721 = vadd.f32 %v1656, %v1720
        %1722 = vmatmul.f32.gmra.mxu0 %v1558
        %v1723 = vpop.f32.mrf.mxu0
        %v1724 = vadd.f32 %v1659, %v1723
        %1725 = vmatmul.f32.gmra.mxu0 %v1559
        %v1726 = vpop.f32.mrf.mxu0
        %v1727 = vadd.f32 %v1662, %v1726
        %1728 = vmatmul.f32.gmra.mxu0 %v1560
        %v1729 = vpop.f32.mrf.mxu0
        %v1730 = vadd.f32 %v1665, %v1729
        %1731 = vmatmul.f32.gmra.mxu0 %v1561
        %v1732 = vpop.f32.mrf.mxu0
        %v1733 = vadd.f32 %v1668, %v1732
        %1734 = vmatmul.f32.gmra.mxu0 %v1562
        %v1735 = vpop.f32.mrf.mxu0
        %v1736 = vadd.f32 %v1671, %v1735
        %1737 = vmatmul.f32.gmra.mxu0 %v1563
        %v1738 = vpop.f32.mrf.mxu0
        %v1739 = vadd.f32 %v1674, %v1738
        %1740 = vmatmul.f32.gmra.mxu0 %v1564
        %v1741 = vpop.f32.mrf.mxu0
        %v1742 = vadd.f32 %v1677, %v1741
        %1743 = vmatmul.f32.gmra.mxu0 %v1565
        %v1744 = vpop.f32.mrf.mxu0
        %v1745 = vadd.f32 %v1680, %v1744
        %1746 = vmatmul.f32.gmra.mxu0 %v1569
        %v1747 = vpop.f32.mrf.mxu0
        %v1748 = vadd.f32 %v1683, %v1747
        %1749 = vdwg.mxu0
        %1750 = vmatpush.msra.mxu0 %v1619
        %1751 = vmatpush.msra.mxu0 %v1618
        %1752 = vmatpush.msra.mxu0 %v1617
        %1753 = vmatpush.msra.mxu0 %v1616
        %1754 = vmatpush.msra.mxu0 %v1615
        %1755 = vmatpush.msra.mxu0 %v1614
        %1756 = vmatpush.msra.mxu0 %v1613
        %1757 = vmatpush.msra.mxu0 %v1612
        %1758 = vmatpush.msra.mxu0 %v1611
        %1759 = vmatpush.msra.mxu0 %v1610
        %1760 = vmatpush.msra.mxu0 %v1609
        %1761 = vmatpush.msra.mxu0 %v1608
        %1762 = vmatpush.msra.mxu0 %v1607
        %1763 = vmatpush.msra.mxu0 %v1606
        %1764 = vmatpush.msra.mxu0 %v1605
        %1765 = vmatpush.msra.mxu0 %v1604
        %1766 = vmatmul.f32.gmra.mxu0 %v1551
        %v1767 = vpop.f32.mrf.mxu0
        %v1768 = vadd.f32 %v1703, %v1767
        %1769 = vmatmul.f32.gmra.mxu0 %v1554
        %v1770 = vpop.f32.mrf.mxu0
        %v1771 = vadd.f32 %v1706, %v1770
        %1772 = vmatmul.f32.gmra.mxu0 %v1555
        %v1773 = vpop.f32.mrf.mxu0
        %v1774 = vadd.f32 %v1709, %v1773
        %1775 = vmatmul.f32.gmra.mxu0 %v1556
        %v1776 = vpop.f32.mrf.mxu0
        %v1777 = vadd.f32 %v1712, %v1776
        %1778 = vmatmul.f32.gmra.mxu0 %v1557
        %v1779 = vpop.f32.mrf.mxu0
        %v1780 = vadd.f32 %v1715, %v1779
        %1781 = vmatmul.f32.gmra.mxu0 %v1558
        %v1782 = vpop.f32.mrf.mxu0
        %v1783 = vadd.f32 %v1718, %v1782
        %1784 = vmatmul.f32.gmra.mxu0 %v1559
        %v1785 = vpop.f32.mrf.mxu0
        %v1786 = vadd.f32 %v1721, %v1785
        %1787 = vmatmul.f32.gmra.mxu0 %v1560
        %v1788 = vpop.f32.mrf.mxu0
        %v1789 = vadd.f32 %v1724, %v1788
        %1790 = vmatmul.f32.gmra.mxu0 %v1561
        %v1791 = vpop.f32.mrf.mxu0
        %v1792 = vadd.f32 %v1727, %v1791
        %1793 = vmatmul.f32.gmra.mxu0 %v1562
        %v1794 = vpop.f32.mrf.mxu0
        %v1795 = vadd.f32 %v1730, %v1794
        %1796 = vmatmul.f32.gmra.mxu0 %v1563
        %v1797 = vpop.f32.mrf.mxu0
        %v1798 = vadd.f32 %v1733, %v1797
        %1799 = vmatmul.f32.gmra.mxu0 %v1564
        %v1800 = vpop.f32.mrf.mxu0
        %v1801 = vadd.f32 %v1736, %v1800
        %1802 = vmatmul.f32.gmra.mxu0 %v1565
        %v1803 = vpop.f32.mrf.mxu0
        %v1804 = vadd.f32 %v1739, %v1803
        %1805 = vmatmul.f32.gmra.mxu0 %v1566
        %v1806 = vpop.f32.mrf.mxu0
        %v1807 = vadd.f32 %v1742, %v1806
        %1808 = vmatmul.f32.gmra.mxu0 %v1567
        %v1809 = vpop.f32.mrf.mxu0
        %v1810 = vadd.f32 %v1745, %v1809
        %1811 = vmatmul.f32.gmra.mxu0 %v1570
        %v1812 = vpop.f32.mrf.mxu0
        %v1813 = vadd.f32 %v1748, %v1812
        %1814 = vdwg.mxu0
        %v1815 = vadd.f32 %v1453, %v1768
        %v1816 = vadd.f32 %v1456, %v1771
        %v1817 = vadd.f32 %v1459, %v1774
        %v1818 = vadd.f32 %v1462, %v1777
        %v1819 = vadd.f32 %v1465, %v1780
        %v1820 = vadd.f32 %v1468, %v1783
        %v1821 = vadd.f32 %v1471, %v1786
        %v1822 = vadd.f32 %v1474, %v1789
        %v1823 = vadd.f32 %v1477, %v1792
        %v1824 = vadd.f32 %v1480, %v1795
        %v1825 = vadd.f32 %v1483, %v1798
        %v1826 = vadd.f32 %v1486, %v1801
        %v1827 = vadd.f32 %v1489, %v1804
        %v1828 = vadd.f32 %v1492, %v1807
        %v1829 = vadd.f32 %v1495, %v1810
        %v1830 = vadd.f32 %v1498, %v1813
        %v1831 = vld [vmem:[%s5] sm:$0x1]
        %v1833 = vperm.slane %v1831, 0
        %v1835 = vadd.f32 %v1815, %v1833
        %v1836 = vadd.f32 %v1816, %v1833
        %v1837 = vadd.f32 %v1817, %v1833
        %v1838 = vadd.f32 %v1818, %v1833
        %v1839 = vadd.f32 %v1819, %v1833
        %v1840 = vadd.f32 %v1820, %v1833
        %v1841 = vadd.f32 %v1821, %v1833
        %v1842 = vadd.f32 %v1822, %v1833
        %v1843 = vadd.f32 %v1823, %v1833
        %v1844 = vadd.f32 %v1824, %v1833
        %v1845 = vadd.f32 %v1825, %v1833
        %v1846 = vadd.f32 %v1826, %v1833
        %v1847 = vadd.f32 %v1827, %v1833
        %v1848 = vadd.f32 %v1828, %v1833
        %v1849 = vadd.f32 %v1829, %v1833
        %v1850 = vadd.f32 %v1830, %v1833
        %v1851 = vxor.u32 %v1835, 2147483648
        %v1852 = vxor.u32 %v1836, 2147483648
        %v1853 = vxor.u32 %v1837, 2147483648
        %v1854 = vxor.u32 %v1838, 2147483648
        %v1855 = vxor.u32 %v1839, 2147483648
        %v1856 = vxor.u32 %v1840, 2147483648
        %v1857 = vxor.u32 %v1841, 2147483648
        %v1858 = vxor.u32 %v1842, 2147483648
        %v1859 = vxor.u32 %v1843, 2147483648
        %v1860 = vxor.u32 %v1844, 2147483648
        %v1861 = vxor.u32 %v1845, 2147483648
        %v1862 = vxor.u32 %v1846, 2147483648
        %v1863 = vxor.u32 %v1847, 2147483648
        %v1864 = vxor.u32 %v1848, 2147483648
        %v1865 = vxor.u32 %v1849, 2147483648
        %v1866 = vxor.u32 %v1850, 2147483648
        %v1867 = vmul.f32 %v1851, 1.442695
        %v1868 = vpow.pop %v1867
        %v1869 = vmul.f32 %v1852, 1.442695
        %v1870 = vpow.pop %v1869
        %v1871 = vmul.f32 %v1853, 1.442695
        %v1872 = vpow.pop %v1871
        %v1873 = vmul.f32 %v1854, 1.442695
        %v1874 = vpow.pop %v1873
        %v1875 = vmul.f32 %v1855, 1.442695
        %v1876 = vpow.pop %v1875
        %v1877 = vmul.f32 %v1856, 1.442695
        %v1878 = vpow.pop %v1877
        %v1879 = vmul.f32 %v1857, 1.442695
        %v1880 = vpow.pop %v1879
        %v1881 = vmul.f32 %v1858, 1.442695
        %v1882 = vpow.pop %v1881
        %v1883 = vmul.f32 %v1859, 1.442695
        %v1884 = vpow.pop %v1883
        %v1885 = vmul.f32 %v1860, 1.442695
        %v1886 = vpow.pop %v1885
        %v1887 = vmul.f32 %v1861, 1.442695
        %v1888 = vpow.pop %v1887
        %v1889 = vmul.f32 %v1862, 1.442695
        %v1890 = vpow.pop %v1889
        %v1891 = vmul.f32 %v1863, 1.442695
        %v1892 = vpow.pop %v1891
        %v1893 = vmul.f32 %v1864, 1.442695
        %v1894 = vpow.pop %v1893
        %v1895 = vmul.f32 %v1865, 1.442695
        %v1896 = vpow.pop %v1895
        %v1897 = vmul.f32 %v1866, 1.442695
        %v1898 = vpow.pop %v1897
        %v1899 = vadd.f32 %v1868, 1.0
        %v1900 = vadd.f32 %v1870, 1.0
        %v1901 = vadd.f32 %v1872, 1.0
        %v1902 = vadd.f32 %v1874, 1.0
        %v1903 = vadd.f32 %v1876, 1.0
        %v1904 = vadd.f32 %v1878, 1.0
        %v1905 = vadd.f32 %v1880, 1.0
        %v1906 = vadd.f32 %v1882, 1.0
        %v1907 = vadd.f32 %v1884, 1.0
        %v1908 = vadd.f32 %v1886, 1.0
        %v1909 = vadd.f32 %v1888, 1.0
        %v1910 = vadd.f32 %v1890, 1.0
        %v1911 = vadd.f32 %v1892, 1.0
        %v1912 = vadd.f32 %v1894, 1.0
        %v1913 = vadd.f32 %v1896, 1.0
        %v1914 = vadd.f32 %v1898, 1.0
        %v1915 = vrcp.pop %v1899
        %v1916 = vmul.f32 %v1899, %v1915
        %v1917 = vsub.f32 1.0, %v1916
        %v1918 = vmul.f32 %v1915, %v1917
        %v1919 = vadd.f32 %v1915, %v1918
        %vm1920 = vweird.f32 %v1899
        %vm1921 = vweird.f32 %v1915
        %vm1922 = vmor %vm1920, %vm1921
        %v1923 = vsel %vm1922, %v1915, %v1919
        %v1924 = vand.u32 2147483647, %v1899
        %vm1925 = vcmp.eq.f32.partialorder %v1924, 8.507059e+37
        %v1926 = vand.u32 %v1899, 2147483648
        %v1927 = vor.u32 1.1754944e-38, %v1926
        %v1928 = vsel %vm1925, %v1927, %v1923
        %v1929 = vmul.f32 1.0, %v1928
        %v1930 = vrcp.pop %v1900
        %v1931 = vmul.f32 %v1900, %v1930
        %v1932 = vsub.f32 1.0, %v1931
        %v1933 = vmul.f32 %v1930, %v1932
        %v1934 = vadd.f32 %v1930, %v1933
        %vm1935 = vweird.f32 %v1900
        %vm1936 = vweird.f32 %v1930
        %vm1937 = vmor %vm1935, %vm1936
        %v1938 = vsel %vm1937, %v1930, %v1934
        %v1939 = vand.u32 2147483647, %v1900
        %vm1940 = vcmp.eq.f32.partialorder %v1939, 8.507059e+37
        %v1941 = vand.u32 %v1900, 2147483648
        %v1942 = vor.u32 1.1754944e-38, %v1941
        %v1943 = vsel %vm1940, %v1942, %v1938
        %v1944 = vmul.f32 1.0, %v1943
        %v1945 = vrcp.pop %v1901
        %v1946 = vmul.f32 %v1901, %v1945
        %v1947 = vsub.f32 1.0, %v1946
        %v1948 = vmul.f32 %v1945, %v1947
        %v1949 = vadd.f32 %v1945, %v1948
        %vm1950 = vweird.f32 %v1901
        %vm1951 = vweird.f32 %v1945
        %vm1952 = vmor %vm1950, %vm1951
        %v1953 = vsel %vm1952, %v1945, %v1949
        %v1954 = vand.u32 2147483647, %v1901
        %vm1955 = vcmp.eq.f32.partialorder %v1954, 8.507059e+37
        %v1956 = vand.u32 %v1901, 2147483648
        %v1957 = vor.u32 1.1754944e-38, %v1956
        %v1958 = vsel %vm1955, %v1957, %v1953
        %v1959 = vmul.f32 1.0, %v1958
        %v1960 = vrcp.pop %v1902
        %v1961 = vmul.f32 %v1902, %v1960
        %v1962 = vsub.f32 1.0, %v1961
        %v1963 = vmul.f32 %v1960, %v1962
        %v1964 = vadd.f32 %v1960, %v1963
        %vm1965 = vweird.f32 %v1902
        %vm1966 = vweird.f32 %v1960
        %vm1967 = vmor %vm1965, %vm1966
        %v1968 = vsel %vm1967, %v1960, %v1964
        %v1969 = vand.u32 2147483647, %v1902
        %vm1970 = vcmp.eq.f32.partialorder %v1969, 8.507059e+37
        %v1971 = vand.u32 %v1902, 2147483648
        %v1972 = vor.u32 1.1754944e-38, %v1971
        %v1973 = vsel %vm1970, %v1972, %v1968
        %v1974 = vmul.f32 1.0, %v1973
        %v1975 = vrcp.pop %v1903
        %v1976 = vmul.f32 %v1903, %v1975
        %v1977 = vsub.f32 1.0, %v1976
        %v1978 = vmul.f32 %v1975, %v1977
        %v1979 = vadd.f32 %v1975, %v1978
        %vm1980 = vweird.f32 %v1903
        %vm1981 = vweird.f32 %v1975
        %vm1982 = vmor %vm1980, %vm1981
        %v1983 = vsel %vm1982, %v1975, %v1979
        %v1984 = vand.u32 2147483647, %v1903
        %vm1985 = vcmp.eq.f32.partialorder %v1984, 8.507059e+37
        %v1986 = vand.u32 %v1903, 2147483648
        %v1987 = vor.u32 1.1754944e-38, %v1986
        %v1988 = vsel %vm1985, %v1987, %v1983
        %v1989 = vmul.f32 1.0, %v1988
        %v1990 = vrcp.pop %v1904
        %v1991 = vmul.f32 %v1904, %v1990
        %v1992 = vsub.f32 1.0, %v1991
        %v1993 = vmul.f32 %v1990, %v1992
        %v1994 = vadd.f32 %v1990, %v1993
        %vm1995 = vweird.f32 %v1904
        %vm1996 = vweird.f32 %v1990
        %vm1997 = vmor %vm1995, %vm1996
        %v1998 = vsel %vm1997, %v1990, %v1994
        %v1999 = vand.u32 2147483647, %v1904
        %vm2000 = vcmp.eq.f32.partialorder %v1999, 8.507059e+37
        %v2001 = vand.u32 %v1904, 2147483648
        %v2002 = vor.u32 1.1754944e-38, %v2001
        %v2003 = vsel %vm2000, %v2002, %v1998
        %v2004 = vmul.f32 1.0, %v2003
        %v2005 = vrcp.pop %v1905
        %v2006 = vmul.f32 %v1905, %v2005
        %v2007 = vsub.f32 1.0, %v2006
        %v2008 = vmul.f32 %v2005, %v2007
        %v2009 = vadd.f32 %v2005, %v2008
        %vm2010 = vweird.f32 %v1905
        %vm2011 = vweird.f32 %v2005
        %vm2012 = vmor %vm2010, %vm2011
        %v2013 = vsel %vm2012, %v2005, %v2009
        %v2014 = vand.u32 2147483647, %v1905
        %vm2015 = vcmp.eq.f32.partialorder %v2014, 8.507059e+37
        %v2016 = vand.u32 %v1905, 2147483648
        %v2017 = vor.u32 1.1754944e-38, %v2016
        %v2018 = vsel %vm2015, %v2017, %v2013
        %v2019 = vmul.f32 1.0, %v2018
        %v2020 = vrcp.pop %v1906
        %v2021 = vmul.f32 %v1906, %v2020
        %v2022 = vsub.f32 1.0, %v2021
        %v2023 = vmul.f32 %v2020, %v2022
        %v2024 = vadd.f32 %v2020, %v2023
        %vm2025 = vweird.f32 %v1906
        %vm2026 = vweird.f32 %v2020
        %vm2027 = vmor %vm2025, %vm2026
        %v2028 = vsel %vm2027, %v2020, %v2024
        %v2029 = vand.u32 2147483647, %v1906
        %vm2030 = vcmp.eq.f32.partialorder %v2029, 8.507059e+37
        %v2031 = vand.u32 %v1906, 2147483648
        %v2032 = vor.u32 1.1754944e-38, %v2031
        %v2033 = vsel %vm2030, %v2032, %v2028
        %v2034 = vmul.f32 1.0, %v2033
        %v2035 = vrcp.pop %v1907
        %v2036 = vmul.f32 %v1907, %v2035
        %v2037 = vsub.f32 1.0, %v2036
        %v2038 = vmul.f32 %v2035, %v2037
        %v2039 = vadd.f32 %v2035, %v2038
        %vm2040 = vweird.f32 %v1907
        %vm2041 = vweird.f32 %v2035
        %vm2042 = vmor %vm2040, %vm2041
        %v2043 = vsel %vm2042, %v2035, %v2039
        %v2044 = vand.u32 2147483647, %v1907
        %vm2045 = vcmp.eq.f32.partialorder %v2044, 8.507059e+37
        %v2046 = vand.u32 %v1907, 2147483648
        %v2047 = vor.u32 1.1754944e-38, %v2046
        %v2048 = vsel %vm2045, %v2047, %v2043
        %v2049 = vmul.f32 1.0, %v2048
        %v2050 = vrcp.pop %v1908
        %v2051 = vmul.f32 %v1908, %v2050
        %v2052 = vsub.f32 1.0, %v2051
        %v2053 = vmul.f32 %v2050, %v2052
        %v2054 = vadd.f32 %v2050, %v2053
        %vm2055 = vweird.f32 %v1908
        %vm2056 = vweird.f32 %v2050
        %vm2057 = vmor %vm2055, %vm2056
        %v2058 = vsel %vm2057, %v2050, %v2054
        %v2059 = vand.u32 2147483647, %v1908
        %vm2060 = vcmp.eq.f32.partialorder %v2059, 8.507059e+37
        %v2061 = vand.u32 %v1908, 2147483648
        %v2062 = vor.u32 1.1754944e-38, %v2061
        %v2063 = vsel %vm2060, %v2062, %v2058
        %v2064 = vmul.f32 1.0, %v2063
        %v2065 = vrcp.pop %v1909
        %v2066 = vmul.f32 %v1909, %v2065
        %v2067 = vsub.f32 1.0, %v2066
        %v2068 = vmul.f32 %v2065, %v2067
        %v2069 = vadd.f32 %v2065, %v2068
        %vm2070 = vweird.f32 %v1909
        %vm2071 = vweird.f32 %v2065
        %vm2072 = vmor %vm2070, %vm2071
        %v2073 = vsel %vm2072, %v2065, %v2069
        %v2074 = vand.u32 2147483647, %v1909
        %vm2075 = vcmp.eq.f32.partialorder %v2074, 8.507059e+37
        %v2076 = vand.u32 %v1909, 2147483648
        %v2077 = vor.u32 1.1754944e-38, %v2076
        %v2078 = vsel %vm2075, %v2077, %v2073
        %v2079 = vmul.f32 1.0, %v2078
        %v2080 = vrcp.pop %v1910
        %v2081 = vmul.f32 %v1910, %v2080
        %v2082 = vsub.f32 1.0, %v2081
        %v2083 = vmul.f32 %v2080, %v2082
        %v2084 = vadd.f32 %v2080, %v2083
        %vm2085 = vweird.f32 %v1910
        %vm2086 = vweird.f32 %v2080
        %vm2087 = vmor %vm2085, %vm2086
        %v2088 = vsel %vm2087, %v2080, %v2084
        %v2089 = vand.u32 2147483647, %v1910
        %vm2090 = vcmp.eq.f32.partialorder %v2089, 8.507059e+37
        %v2091 = vand.u32 %v1910, 2147483648
        %v2092 = vor.u32 1.1754944e-38, %v2091
        %v2093 = vsel %vm2090, %v2092, %v2088
        %v2094 = vmul.f32 1.0, %v2093
        %v2095 = vrcp.pop %v1911
        %v2096 = vmul.f32 %v1911, %v2095
        %v2097 = vsub.f32 1.0, %v2096
        %v2098 = vmul.f32 %v2095, %v2097
        %v2099 = vadd.f32 %v2095, %v2098
        %vm2100 = vweird.f32 %v1911
        %vm2101 = vweird.f32 %v2095
        %vm2102 = vmor %vm2100, %vm2101
        %v2103 = vsel %vm2102, %v2095, %v2099
        %v2104 = vand.u32 2147483647, %v1911
        %vm2105 = vcmp.eq.f32.partialorder %v2104, 8.507059e+37
        %v2106 = vand.u32 %v1911, 2147483648
        %v2107 = vor.u32 1.1754944e-38, %v2106
        %v2108 = vsel %vm2105, %v2107, %v2103
        %v2109 = vmul.f32 1.0, %v2108
        %v2110 = vrcp.pop %v1912
        %v2111 = vmul.f32 %v1912, %v2110
        %v2112 = vsub.f32 1.0, %v2111
        %v2113 = vmul.f32 %v2110, %v2112
        %v2114 = vadd.f32 %v2110, %v2113
        %vm2115 = vweird.f32 %v1912
        %vm2116 = vweird.f32 %v2110
        %vm2117 = vmor %vm2115, %vm2116
        %v2118 = vsel %vm2117, %v2110, %v2114
        %v2119 = vand.u32 2147483647, %v1912
        %vm2120 = vcmp.eq.f32.partialorder %v2119, 8.507059e+37
        %v2121 = vand.u32 %v1912, 2147483648
        %v2122 = vor.u32 1.1754944e-38, %v2121
        %v2123 = vsel %vm2120, %v2122, %v2118
        %v2124 = vmul.f32 1.0, %v2123
        %v2125 = vrcp.pop %v1913
        %v2126 = vmul.f32 %v1913, %v2125
        %v2127 = vsub.f32 1.0, %v2126
        %v2128 = vmul.f32 %v2125, %v2127
        %v2129 = vadd.f32 %v2125, %v2128
        %vm2130 = vweird.f32 %v1913
        %vm2131 = vweird.f32 %v2125
        %vm2132 = vmor %vm2130, %vm2131
        %v2133 = vsel %vm2132, %v2125, %v2129
        %v2134 = vand.u32 2147483647, %v1913
        %vm2135 = vcmp.eq.f32.partialorder %v2134, 8.507059e+37
        %v2136 = vand.u32 %v1913, 2147483648
        %v2137 = vor.u32 1.1754944e-38, %v2136
        %v2138 = vsel %vm2135, %v2137, %v2133
        %v2139 = vmul.f32 1.0, %v2138
        %v2140 = vrcp.pop %v1914
        %v2141 = vmul.f32 %v1914, %v2140
        %v2142 = vsub.f32 1.0, %v2141
        %v2143 = vmul.f32 %v2140, %v2142
        %v2144 = vadd.f32 %v2140, %v2143
        %vm2145 = vweird.f32 %v1914
        %vm2146 = vweird.f32 %v2140
        %vm2147 = vmor %vm2145, %vm2146
        %v2148 = vsel %vm2147, %v2140, %v2144
        %v2149 = vand.u32 2147483647, %v1914
        %vm2150 = vcmp.eq.f32.partialorder %v2149, 8.507059e+37
        %v2151 = vand.u32 %v1914, 2147483648
        %v2152 = vor.u32 1.1754944e-38, %v2151
        %v2153 = vsel %vm2150, %v2152, %v2148
        %v2154 = vmul.f32 1.0, %v2153
        %v2155 = vmul.f32 %v1835, %v1929
        %v2156 = vmul.f32 %v1836, %v1944
        %v2157 = vmul.f32 %v1837, %v1959
        %v2158 = vmul.f32 %v1838, %v1974
        %v2159 = vmul.f32 %v1839, %v1989
        %v2160 = vmul.f32 %v1840, %v2004
        %v2161 = vmul.f32 %v1841, %v2019
        %v2162 = vmul.f32 %v1842, %v2034
        %v2163 = vmul.f32 %v1843, %v2049
        %v2164 = vmul.f32 %v1844, %v2064
        %v2165 = vmul.f32 %v1845, %v2079
        %v2166 = vmul.f32 %v1846, %v2094
        %v2167 = vmul.f32 %v1847, %v2109
        %v2168 = vmul.f32 %v1848, %v2124
        %v2169 = vmul.f32 %v1849, %v2139
        %v2170 = vmul.f32 %v1850, %v2154
        %v2171 = vadd.f32 %v2155, %v360
        %v2172 = vadd.f32 %v2156, %v361
        %v2173 = vadd.f32 %v2157, %v362
        %v2174 = vadd.f32 %v2158, %v363
        %v2175 = vadd.f32 %v2159, %v364
        %v2176 = vadd.f32 %v2160, %v365
        %v2177 = vadd.f32 %v2161, %v366
        %v2178 = vadd.f32 %v2162, %v367
        %v2179 = vadd.f32 %v2163, %v368
        %v2180 = vadd.f32 %v2164, %v369
        %v2181 = vadd.f32 %v2165, %v370
        %v2182 = vadd.f32 %v2166, %v371
        %v2183 = vadd.f32 %v2167, %v372
        %v2184 = vadd.f32 %v2168, %v373
        %v2185 = vadd.f32 %v2169, %v374
        %v2186 = vadd.f32 %v2170, %v375
        %2187 = vst [vmem:[%s297] sm:$0xff] %v2171
        %2188 = vst [vmem:[%s297 + $0x8] sm:$0xff] %v2172
        %2189 = vst [vmem:[%s297 + $0x10] sm:$0xff] %v2173
        %2190 = vst [vmem:[%s297 + $0x18] sm:$0xff] %v2174
        %2191 = vst [vmem:[%s297 + $0x20] sm:$0xff] %v2175
        %2192 = vst [vmem:[%s297 + $0x28] sm:$0xff] %v2176
        %2193 = vst [vmem:[%s297 + $0x30] sm:$0xff] %v2177
        %2194 = vst [vmem:[%s297 + $0x38] sm:$0xff] %v2178
        %2195 = vst [vmem:[%s297 + $0x40] sm:$0xff] %v2179
        %2196 = vst [vmem:[%s297 + $0x48] sm:$0xff] %v2180
        %2197 = vst [vmem:[%s297 + $0x50] sm:$0xff] %v2181
        %2198 = vst [vmem:[%s297 + $0x58] sm:$0xff] %v2182
        %2199 = vst [vmem:[%s297 + $0x60] sm:$0xff] %v2183
        %2200 = vst [vmem:[%s297 + $0x68] sm:$0xff] %v2184
        %2201 = vst [vmem:[%s297 + $0x70] sm:$0xff] %v2185
        %2202 = vst [vmem:[%s297 + $0x78] sm:$0xff] %v2186
        %s2203 = sand.u32 %s158, 1
        %s2204 = scalar_lea.sflag [#allocation6], %s2203
        %s2205 = sand.u32 %s158, 1
        %s2206 = smul.addr %s2205, 128
        %s2207 = scalar_lea.vmem [#allocation10], %s2206
        // Predicated region
        $region85: #{tpu_custom_call.1} parent=39 // pred_check
          %p2208 = pneg %p168
        $region86: #{tpu_custom_call.1} parent=39 // pred_check_branch
          %2210 = sbr.rel (%p2208) target = $region88
        $region87: #{tpu_custom_call.1} parent=39 // pred_region
          %s2211 = smul.u32 8, %s29
          %2213 = vsyncadd %s2204, 0
          %s2214 = smul.addr %s2211, 2
          %s2215 = smul.addr %s28, 32
          %s2216 = sadd.s32 %s2214, %s2215
          %s2217 = smul.addr %s2216, 8
          %s2218 = scalar_lea.hbm %s6, %s2217
          %s2219 = sshll.u32 %s2207, 4
          %s2220 = int_to_ptr.vmem [resolvable:$true] %s2219
          %s2221 = sshll.u32 %s2218, 4
          %s2222 = int_to_ptr.hbm [resolvable:$true] %s2221
          %2227 = dma.vmem_to_hbm [thread:$0]  %s2220, 2048, %s2222, %s2204, 128, 128, 8
        $region88: #{tpu_custom_call.1} parent=39 // pred_fallthru
          _
      $region40: #{tpu_custom_call.1} parent=5 // pred_fallthru
        _
      %p2228 = scmp.le.s32.totalorder 2, %s19
      // Predicated region
      $region89: #{tpu_custom_call.1} parent=5 // pred_check
        %p2229 = pneg %p2228
      $region90: #{tpu_custom_call.1} parent=5 // pred_check_branch
        %2231 = sbr.rel (%p2229) target = $region92
      $region91: #{tpu_custom_call.1} parent=5 // pred_region
        %s2232 = ssub.s32 %s19, 2
        // Predicated region
        $region93: #{tpu_custom_call.1} parent=91 // pred_check
          %p2233 = pneg %p174
        $region94: #{tpu_custom_call.1} parent=91 // pred_check_branch
          %2235 = sbr.rel (%p2233) target = $region96
        $region95: #{tpu_custom_call.1} parent=91 // pred_region
          %s2236 = sand.u32 %s159, 1
          %s2237 = scalar_lea.sflag [#allocation6], %s2236
          %s2238 = sand.u32 %s159, 1
          %s2239 = smul.addr %s2238, 128
          %s2240 = scalar_lea.vmem [#allocation10], %s2239
          %2242 = dma.done %s2237, 2048
        $region96: #{tpu_custom_call.1} parent=91 // pred_fallthru
          _
      $region92: #{tpu_custom_call.1} parent=5 // pred_fallthru
        _
    $region6: #{tpu_custom_call.1} parent=1 // loop_footer
      %s23 = sadd.s32 1, %s19
    $region7: #{tpu_custom_call.1} parent=1 // loop_footer_branch
      %18 = sbr.rel target = $region3
    $region8: #{tpu_custom_call.1} parent=1 // loop_exit
      _
    %2243 = vsyncpa [#allocation5], 1
    %s2244 = scalar_lea.sflag [#allocation5], 1
    %2245 = vsyncpa %s2244, 1
    %2246 = vsyncpa [#allocation8], 1
    %2247 = vsyncpa [#allocation6], 1
    %s2248 = scalar_lea.sflag [#allocation6], 1
    %2249 = vsyncpa %s2248, 1
  %2250 = vsyncmov [#allocation3]
  %s2251 = vpop.sfrf %2250
  %p2252 = scmp.eq.s32.totalorder %s2251, 0
  %p2253 = pneg %p2252
  %2255 = shalt.err (%p2253)
  %s2256 = scalar_lea.sflag [#allocation3], 1
  %2257 = vsyncmov %s2256
  %s2258 = vpop.sfrf %2257
  %p2259 = scmp.eq.s32.totalorder %s2258, 0
  %p2260 = pneg %p2259
  %2262 = shalt.err (%p2260)

</llo_original>
